<compile_context>
chip_gen: v6e
topology: v6e:2x2x1
jax: 0.10.0
libtpu: 0.0.40
codegen_flags: <defaults>
</compile_context>

<pallas_src>
import functools

import jax
import jax.numpy as jnp
from jax import lax
from jax.experimental import pallas as pl
from jax.experimental.pallas import tpu as pltpu


# ---------------------------------------------------------------------------
# Fused encoder kernel: one grid step = one (Bt, S, E) batch block in VMEM.
# All matmuls run on (M, .) with M = Bt*S rows; attention is batched over the
# (head, batch-row) axis with 3-D einsums.
# ---------------------------------------------------------------------------
def _encoder_kernel(x_ref, ln1_w_ref, ln1_b_ref, wqkv_ref, bqkv_ref,
                    wo_ref, bo_ref, ln2_w_ref, ln2_b_ref,
                    w1_ref, b1_ref, w2_ref, b2_ref, out_ref,
                    *, num_heads, eps):
    bf16, f32 = jnp.bfloat16, jnp.float32
    Bt, S, E = x_ref.shape
    M = Bt * S
    H = num_heads
    Dh = E // H

    x = x_ref[...].reshape(M, E)                       # already f32, no astype

    # ---- LayerNorm 1 (f32) ----
    mu = jnp.mean(x, axis=-1, keepdims=True)
    var = jnp.mean(jnp.square(x - mu), axis=-1, keepdims=True)
    xn = (x - mu) * lax.rsqrt(var + eps)
    xn = xn * ln1_w_ref[...] + ln1_b_ref[...]

    # ---- Packed QKV projection (bf16 operands, f32 MXU accumulation).
    #      1/sqrt(Dh) is already folded into the Q columns of wqkv/bqkv. ----
    qkv = jnp.dot(xn.astype(bf16), wqkv_ref[...],
                  preferred_element_type=f32) + bqkv_ref[...]          # (M, 3E)
    q = qkv[:, 0 * E:1 * E]
    k = qkv[:, 1 * E:2 * E]
    v = qkv[:, 2 * E:3 * E]

    # ---- Move heads to a leading batch axis WITHOUT transposes:
    #      static lane slices + concat along rows + reshape.
    #      Row order after concat is (h, b, s) so group g = h*Bt + b. ----
    def split_heads(t):
        cols = [t[:, h * Dh:(h + 1) * Dh] for h in range(H)]   # H x (M, Dh)
        return jnp.concatenate(cols, axis=0).reshape(H * Bt, S, Dh)

    qh = split_heads(q).astype(bf16)
    kh = split_heads(k).astype(bf16)
    vh = split_heads(v).astype(bf16)

    # ---- Scaled dot-product attention, batched over (H*Bt) groups ----
    s = jnp.einsum("bqd,bkd->bqk", qh, kh,
                   preferred_element_type=f32)                  # (H*Bt, S, S)
    s = s - jnp.max(s, axis=-1, keepdims=True)
    p = jnp.exp(s)
    p = p / jnp.sum(p, axis=-1, keepdims=True)                  # exact softmax
    o = jnp.einsum("bqk,bkd->bqd", p.astype(bf16), vh,
                   preferred_element_type=f32)                  # (H*Bt, S, Dh)

    # ---- Merge heads back to (M, E): inverse of split_heads ----
    o2 = o.reshape(H * M, Dh)
    attn = jnp.concatenate([o2[h * M:(h + 1) * M, :] for h in range(H)],
                           axis=-1)                             # (M, E)

    attn = jnp.dot(attn.astype(bf16), wo_ref[...],
                   preferred_element_type=f32) + bo_ref[...]

    x1 = x + attn                                               # residual 1

    # ---- LayerNorm 2 (f32) ----
    mu2 = jnp.mean(x1, axis=-1, keepdims=True)
    var2 = jnp.mean(jnp.square(x1 - mu2), axis=-1, keepdims=True)
    yn = (x1 - mu2) * lax.rsqrt(var2 + eps)
    yn = yn * ln2_w_ref[...] + ln2_b_ref[...]

    # ---- Feed-forward (bf16 operands, f32 accumulation) ----
    y = jnp.dot(yn.astype(bf16), w1_ref[...],
                preferred_element_type=f32) + b1_ref[...]
    y = jnp.maximum(y, 0.0)
    y = jnp.dot(y.astype(bf16), w2_ref[...],
                preferred_element_type=f32) + b2_ref[...]

    out_ref[...] = (x1 + y).reshape(Bt, S, E).astype(out_ref.dtype)


# ---------------------------------------------------------------------------
# Host-side configuration helpers
# ---------------------------------------------------------------------------
def _vmem_limit_bytes():
    """Per-generation scoped-VMEM limit with headroom for compiler scratch."""
    try:
        cap = pltpu.get_tpu_info().vmem_capacity_bytes
    except Exception:
        cap = 128 * 1024 * 1024
    # ~51 MiB on v7x (64 MiB physical), 100 MiB on v5e/v6e (128 MiB physical).
    return min(int(cap * 0.8), 100 * 1024 * 1024)


def _choose_batch_block(B, S, E, ff_dim, num_heads, vmem_budget_bytes):
    """Largest divisor of B whose per-step activations fit the budget,
    preferring the smallest block reaching >=256 matmul rows (MXU M)."""
    def act_bytes(bt):
        m = bt * S
        per_row = (4 * E + 3 * E + ff_dim) * 4 * 2          # f32 acts + bf16 copies
        scores = 2 * num_heads * bt * S * S * 4             # scores + probs (f32)
        return m * per_row + scores

    divisors = [d for d in range(1, B + 1) if B % d == 0]
    fitting = [d for d in divisors if act_bytes(d) <= vmem_budget_bytes] or [1]
    for d in fitting:
        if d * S >= 256:
            return d
    return fitting[-1]


# ---------------------------------------------------------------------------
# pallas_call builder
# ---------------------------------------------------------------------------
def make_encoder(x_shape, params, *, num_heads, eps):
    B, S, E = x_shape
    F = params["w1_t"].shape[1]
    vmem_limit = _vmem_limit_bytes()
    Bt = _choose_batch_block(B, S, E, F, num_heads, vmem_limit // 2)
    grid = (B // Bt,)

    weights = (
        params["ln1_w"], params["ln1_b"],
        params["wqkv_t"], params["bqkv"],
        params["wo_t"], params["bo"],
        params["ln2_w"], params["ln2_b"],
        params["w1_t"], params["b1"],
        params["w2_t"], params["b2"],
    )
    # Grid-invariant weights: full-array blocks with constant index maps.
    w_specs = [pl.BlockSpec(w.shape, lambda b: (0, 0)) for w in weights]

    kernel = functools.partial(_encoder_kernel, num_heads=num_heads, eps=eps)
    call = pl.pallas_call(
        kernel,
        out_shape=jax.ShapeDtypeStruct((B, S, E), jnp.float32),
        grid=grid,
        in_specs=[pl.BlockSpec((Bt, S, E), lambda b: (b, 0, 0))] + w_specs,
        out_specs=pl.BlockSpec((Bt, S, E), lambda b: (b, 0, 0)),
        compiler_params=pltpu.CompilerParams(
            dimension_semantics=("parallel",),   # split batch blocks across TCs
            vmem_limit_bytes=vmem_limit,
        ),
    )

    def run(x):
        return call(x, *weights)

    return run


def transformer_encoder(x, params, *, num_heads, eps=1e-6):
    run = make_encoder(x.shape, params, num_heads=num_heads, eps=eps)
    return run(x)


# ---------------------------------------------------------------------------
# Pure-JAX reference mirroring the kernel's bf16 matmul rounding
# (consumes the same params, i.e. the softmax scale is already folded in).
# ---------------------------------------------------------------------------
def reference(x, p, num_heads, eps=1e-6):
    bf16, f32 = jnp.bfloat16, jnp.float32

    def mm(a, w):
        return jnp.dot(a.astype(bf16), w.astype(bf16), preferred_element_type=f32)

    def ln(z, w, b):
        mu = jnp.mean(z, -1, keepdims=True)
        var = jnp.mean(jnp.square(z - mu), -1, keepdims=True)
        return (z - mu) / jnp.sqrt(var + eps) * w + b

    B, S, E = x.shape
    H = num_heads
    Dh = E // H
    xn = ln(x, p["ln1_w"][0], p["ln1_b"][0])
    qkv = mm(xn, p["wqkv_t"]) + p["bqkv"][0]
    q, k, v = jnp.split(qkv, 3, axis=-1)
    q = q.reshape(B, S, H, Dh).transpose(0, 2, 1, 3)
    k = k.reshape(B, S, H, Dh).transpose(0, 2, 1, 3)
    v = v.reshape(B, S, H, Dh).transpose(0, 2, 1, 3)
    s = jnp.einsum("bhqd,bhkd->bhqk", q.astype(bf16), k.astype(bf16),
                   preferred_element_type=f32)
    a = jax.nn.softmax(s, axis=-1)
    o = jnp.einsum("bhqk,bhkd->bhqd", a.astype(bf16), v.astype(bf16),
                   preferred_element_type=f32)
    o = o.transpose(0, 2, 1, 3).reshape(B, S, E)
    o = mm(o, p["wo_t"]) + p["bo"][0]
    x1 = x + o
    yn = ln(x1, p["ln2_w"][0], p["ln2_b"][0])
    y = jnp.maximum(mm(yn, p["w1_t"]) + p["b1"][0], 0.0)
    y = mm(y, p["w2_t"]) + p["b2"][0]
    return x1 + y


# ---------------------------------------------------------------------------
# Parameter construction (PyTorch-shaped, pre-transposed for x @ W_t + b).
# Matmul weights are bf16; biases / LayerNorm params stay f32.
# The attention softmax scale is folded into the Q columns of the QKV weight.
# ---------------------------------------------------------------------------
def make_params(key, embed_dim, ff_dim, num_heads):
    ks = jax.random.split(key, 12)
    E, F = embed_dim, ff_dim
    sE, sF = 1.0 / (E ** 0.5), 1.0 / (F ** 0.5)
    in_proj_w = sE * jax.random.normal(ks[0], (3 * E, E), jnp.float32)
    in_proj_b = 0.1 * jax.random.normal(ks[1], (3 * E,), jnp.float32)
    out_proj_w = sE * jax.random.normal(ks[2], (E, E), jnp.float32)
    out_proj_b = 0.1 * jax.random.normal(ks[3], (E,), jnp.float32)
    fc1_w = sE * jax.random.normal(ks[4], (F, E), jnp.float32)
    fc1_b = 0.1 * jax.random.normal(ks[5], (F,), jnp.float32)
    fc2_w = sF * jax.random.normal(ks[6], (E, F), jnp.float32)
    fc2_b = 0.1 * jax.random.normal(ks[7], (E,), jnp.float32)
    ln1_w = 1.0 + 0.1 * jax.random.normal(ks[8], (E,), jnp.float32)
    ln1_b = 0.1 * jax.random.normal(ks[9], (E,), jnp.float32)
    ln2_w = 1.0 + 0.1 * jax.random.normal(ks[10], (E,), jnp.float32)
    ln2_b = 0.1 * jax.random.normal(ks[11], (E,), jnp.float32)

    # Fold the 1/sqrt(head_dim) attention scale into the Q projection (offline,
    # one-time transform: (x@Wq + bq) * s == x@(Wq*s) + bq*s).
    head_dim = E // num_heads
    scale = 1.0 / (head_dim ** 0.5)
    wqkv_t = in_proj_w.T
    wqkv_t = wqkv_t.at[:, :E].multiply(scale)
    bqkv = in_proj_b.at[:E].multiply(scale)

    bf16 = jnp.bfloat16
    return {
        "ln1_w": ln1_w.reshape(1, E), "ln1_b": ln1_b.reshape(1, E),
        "wqkv_t": wqkv_t.astype(bf16), "bqkv": bqkv.reshape(1, 3 * E),
        "wo_t": out_proj_w.T.astype(bf16), "bo": out_proj_b.reshape(1, E),
        "ln2_w": ln2_w.reshape(1, E), "ln2_b": ln2_b.reshape(1, E),
        "w1_t": fc1_w.T.astype(bf16), "b1": fc1_b.reshape(1, F),
        "w2_t": fc2_w.T.astype(bf16), "b2": fc2_b.reshape(1, E),
    }


if __name__ == "__main__":
    B, S, E, H, FF = 2, 8, 32, 4, 64
    key = jax.random.PRNGKey(0)
    kx, kp = jax.random.split(key)
    x = jax.random.normal(kx, (B, S, E), jnp.float32)
    params = make_params(kp, E, FF, num_heads=H)

    out = transformer_encoder(x, params, num_heads=H, eps=1e-6)
    out = jax.block_until_ready(out)

    ref = reference(x, params, H, eps=1e-6)
    assert out.shape == (B, S, E) and out.dtype == jnp.float32
    assert jnp.allclose(out, ref, atol=2e-2, rtol=2e-2), "mismatch vs JAX reference"
    print("KERNEL_OK")
</pallas_src>

<mosaic_0001>
module attributes {stable_mosaic.version = 11 : i64} {
  func.func @_encoder_kernel(%arg0: i32, %arg1: memref<2x8x32xf32, #tpu.memory_space<vmem>>, %arg2: memref<1x32xf32, #tpu.memory_space<vmem>>, %arg3: memref<1x32xf32, #tpu.memory_space<vmem>>, %arg4: memref<32x96xbf16, #tpu.memory_space<vmem>>, %arg5: memref<1x96xf32, #tpu.memory_space<vmem>>, %arg6: memref<32x32xbf16, #tpu.memory_space<vmem>>, %arg7: memref<1x32xf32, #tpu.memory_space<vmem>>, %arg8: memref<1x32xf32, #tpu.memory_space<vmem>>, %arg9: memref<1x32xf32, #tpu.memory_space<vmem>>, %arg10: memref<32x64xbf16, #tpu.memory_space<vmem>>, %arg11: memref<1x64xf32, #tpu.memory_space<vmem>>, %arg12: memref<64x32xbf16, #tpu.memory_space<vmem>>, %arg13: memref<1x32xf32, #tpu.memory_space<vmem>>, %arg14: memref<2x8x32xf32, #tpu.memory_space<vmem>>) attributes {dimension_semantics = [#tpu.dimension_semantics<parallel>], iteration_bounds = array<i64: 1>, scalar_prefetch = 0 : i64, scratch_operands = 0 : i64, tpu.core_type = #tpu.core_type<tc>, window_params = [{transform_indices = @transform_0, window_bounds = array<i64: 2, 8, 32>}, {pipeline_mode = #tpu.pipeline_mode<synchronous>, transform_indices = @transform_1, window_bounds = array<i64: 1, 32>}, {pipeline_mode = #tpu.pipeline_mode<synchronous>, transform_indices = @transform_2, window_bounds = array<i64: 1, 32>}, {pipeline_mode = #tpu.pipeline_mode<synchronous>, transform_indices = @transform_3, window_bounds = array<i64: 32, 96>}, {pipeline_mode = #tpu.pipeline_mode<synchronous>, transform_indices = @transform_4, window_bounds = array<i64: 1, 96>}, {pipeline_mode = #tpu.pipeline_mode<synchronous>, transform_indices = @transform_5, window_bounds = array<i64: 32, 32>}, {pipeline_mode = #tpu.pipeline_mode<synchronous>, transform_indices = @transform_6, window_bounds = array<i64: 1, 32>}, {pipeline_mode = #tpu.pipeline_mode<synchronous>, transform_indices = @transform_7, window_bounds = array<i64: 1, 32>}, {pipeline_mode = #tpu.pipeline_mode<synchronous>, transform_indices = @transform_8, window_bounds = array<i64: 1, 32>}, {pipeline_mode = #tpu.pipeline_mode<synchronous>, transform_indices = @transform_9, window_bounds = array<i64: 32, 64>}, {pipeline_mode = #tpu.pipeline_mode<synchronous>, transform_indices = @transform_10, window_bounds = array<i64: 1, 64>}, {pipeline_mode = #tpu.pipeline_mode<synchronous>, transform_indices = @transform_11, window_bounds = array<i64: 64, 32>}, {pipeline_mode = #tpu.pipeline_mode<synchronous>, transform_indices = @transform_12, window_bounds = array<i64: 1, 32>}, {transform_indices = @transform_13, window_bounds = array<i64: 2, 8, 32>}]} {
    %c0 = arith.constant 0 : index
    %c0_0 = arith.constant 0 : index
    %c0_1 = arith.constant 0 : index
    %0 = vector.load %arg1[%c0, %c0_0, %c0_1] : memref<2x8x32xf32, #tpu.memory_space<vmem>>, vector<2x8x32xf32>
    %1 = vector.shape_cast %0 : vector<2x8x32xf32> to vector<16x32xf32>
    %cst = arith.constant dense<0.000000e+00> : vector<16xf32>
    %2 = vector.multi_reduction <add>, %1, %cst [1] : vector<16x32xf32> to vector<16xf32>
    %3 = vector.shape_cast %2 : vector<16xf32> to vector<16x1xf32>
    %cst_2 = arith.constant 3.200000e+01 : f32
    %4 = vector.broadcast %cst_2 : f32 to vector<16x1xf32>
    %5 = arith.divf %3, %4 : vector<16x1xf32>
    %6 = vector.broadcast %5 : vector<16x1xf32> to vector<16x32xf32>
    %7 = arith.subf %1, %6 : vector<16x32xf32>
    %8 = arith.mulf %7, %7 : vector<16x32xf32>
    %cst_3 = arith.constant dense<0.000000e+00> : vector<16xf32>
    %9 = vector.multi_reduction <add>, %8, %cst_3 [1] : vector<16x32xf32> to vector<16xf32>
    %10 = vector.shape_cast %9 : vector<16xf32> to vector<16x1xf32>
    %cst_4 = arith.constant 3.200000e+01 : f32
    %11 = vector.broadcast %cst_4 : f32 to vector<16x1xf32>
    %12 = arith.divf %10, %11 : vector<16x1xf32>
    %13 = vector.broadcast %5 : vector<16x1xf32> to vector<16x32xf32>
    %14 = arith.subf %1, %13 : vector<16x32xf32>
    %cst_5 = arith.constant 9.99999997E-7 : f32
    %15 = vector.broadcast %cst_5 : f32 to vector<16x1xf32>
    %16 = arith.addf %12, %15 : vector<16x1xf32>
    %17 = math.rsqrt %16 : vector<16x1xf32>
    %18 = vector.broadcast %17 : vector<16x1xf32> to vector<16x32xf32>
    %19 = arith.mulf %14, %18 : vector<16x32xf32>
    %c0_6 = arith.constant 0 : index
    %c0_7 = arith.constant 0 : index
    %20 = vector.load %arg2[%c0_6, %c0_7] : memref<1x32xf32, #tpu.memory_space<vmem>>, vector<1x32xf32>
    %21 = vector.broadcast %20 : vector<1x32xf32> to vector<16x32xf32>
    %22 = arith.mulf %19, %21 : vector<16x32xf32>
    %c0_8 = arith.constant 0 : index
    %c0_9 = arith.constant 0 : index
    %23 = vector.load %arg3[%c0_8, %c0_9] : memref<1x32xf32, #tpu.memory_space<vmem>>, vector<1x32xf32>
    %24 = vector.broadcast %23 : vector<1x32xf32> to vector<16x32xf32>
    %25 = arith.addf %22, %24 : vector<16x32xf32>
    %26 = arith.truncf %25 : vector<16x32xf32> to vector<16x32xbf16>
    %c0_10 = arith.constant 0 : index
    %c0_11 = arith.constant 0 : index
    %27 = vector.load %arg4[%c0_10, %c0_11] : memref<32x96xbf16, #tpu.memory_space<vmem>>, vector<32x96xbf16>
    %cst_12 = arith.constant dense<0.000000e+00> : vector<16x96xf32>
    %28 = tpu.matmul %26, %27, %cst_12 {dimension_numbers = #tpu.dot_dimension_numbers<[1], [0], [0], [1], [0, 0, 1, 1], [], []>} : vector<16x32xbf16>, vector<32x96xbf16>, vector<16x96xf32> -> vector<16x96xf32>
    %c0_13 = arith.constant 0 : index
    %c0_14 = arith.constant 0 : index
    %29 = vector.load %arg5[%c0_13, %c0_14] : memref<1x96xf32, #tpu.memory_space<vmem>>, vector<1x96xf32>
    %30 = vector.broadcast %29 : vector<1x96xf32> to vector<16x96xf32>
    %31 = arith.addf %28, %30 : vector<16x96xf32>
    %32 = vector.extract_strided_slice %31 {offsets = [0, 0], sizes = [16, 32], strides = [1, 1]} : vector<16x96xf32> to vector<16x32xf32>
    %33 = vector.extract_strided_slice %31 {offsets = [0, 32], sizes = [16, 32], strides = [1, 1]} : vector<16x96xf32> to vector<16x32xf32>
    %34 = vector.extract_strided_slice %31 {offsets = [0, 64], sizes = [16, 32], strides = [1, 1]} : vector<16x96xf32> to vector<16x32xf32>
    %35 = vector.extract_strided_slice %32 {offsets = [0, 0], sizes = [16, 8], strides = [1, 1]} : vector<16x32xf32> to vector<16x8xf32>
    %36 = vector.extract_strided_slice %32 {offsets = [0, 8], sizes = [16, 8], strides = [1, 1]} : vector<16x32xf32> to vector<16x8xf32>
    %37 = vector.extract_strided_slice %32 {offsets = [0, 16], sizes = [16, 8], strides = [1, 1]} : vector<16x32xf32> to vector<16x8xf32>
    %38 = vector.extract_strided_slice %32 {offsets = [0, 24], sizes = [16, 8], strides = [1, 1]} : vector<16x32xf32> to vector<16x8xf32>
    %39 = tpu.concatenate %35, %36, %37, %38 in 0 : vector<16x8xf32>, vector<16x8xf32>, vector<16x8xf32>, vector<16x8xf32> -> vector<64x8xf32>
    %40 = vector.shape_cast %39 : vector<64x8xf32> to vector<8x8x8xf32>
    %41 = arith.truncf %40 : vector<8x8x8xf32> to vector<8x8x8xbf16>
    %42 = vector.extract_strided_slice %33 {offsets = [0, 0], sizes = [16, 8], strides = [1, 1]} : vector<16x32xf32> to vector<16x8xf32>
    %43 = vector.extract_strided_slice %33 {offsets = [0, 8], sizes = [16, 8], strides = [1, 1]} : vector<16x32xf32> to vector<16x8xf32>
    %44 = vector.extract_strided_slice %33 {offsets = [0, 16], sizes = [16, 8], strides = [1, 1]} : vector<16x32xf32> to vector<16x8xf32>
    %45 = vector.extract_strided_slice %33 {offsets = [0, 24], sizes = [16, 8], strides = [1, 1]} : vector<16x32xf32> to vector<16x8xf32>
    %46 = tpu.concatenate %42, %43, %44, %45 in 0 : vector<16x8xf32>, vector<16x8xf32>, vector<16x8xf32>, vector<16x8xf32> -> vector<64x8xf32>
    %47 = vector.shape_cast %46 : vector<64x8xf32> to vector<8x8x8xf32>
    %48 = arith.truncf %47 : vector<8x8x8xf32> to vector<8x8x8xbf16>
    %49 = vector.extract_strided_slice %34 {offsets = [0, 0], sizes = [16, 8], strides = [1, 1]} : vector<16x32xf32> to vector<16x8xf32>
    %50 = vector.extract_strided_slice %34 {offsets = [0, 8], sizes = [16, 8], strides = [1, 1]} : vector<16x32xf32> to vector<16x8xf32>
    %51 = vector.extract_strided_slice %34 {offsets = [0, 16], sizes = [16, 8], strides = [1, 1]} : vector<16x32xf32> to vector<16x8xf32>
    %52 = vector.extract_strided_slice %34 {offsets = [0, 24], sizes = [16, 8], strides = [1, 1]} : vector<16x32xf32> to vector<16x8xf32>
    %53 = tpu.concatenate %49, %50, %51, %52 in 0 : vector<16x8xf32>, vector<16x8xf32>, vector<16x8xf32>, vector<16x8xf32> -> vector<64x8xf32>
    %54 = vector.shape_cast %53 : vector<64x8xf32> to vector<8x8x8xf32>
    %55 = arith.truncf %54 : vector<8x8x8xf32> to vector<8x8x8xbf16>
    "tpu.trace_start"() <{level = 10 : i32, message = "bqd,bkd->bqk"}> : () -> ()
    %cst_15 = arith.constant dense<0.000000e+00> : vector<8x8x8xf32>
    %56 = tpu.matmul %41, %48, %cst_15 {dimension_numbers = #tpu.dot_dimension_numbers<[2], [2], [1], [1], [0, 0, 0, 1, 1, 1], [0], [0]>} : vector<8x8x8xbf16>, vector<8x8x8xbf16>, vector<8x8x8xf32> -> vector<8x8x8xf32>
    "tpu.trace_stop"() : () -> ()
    %cst_16 = arith.constant dense<0xFF800000> : vector<8x8xf32>
    %57 = vector.multi_reduction <maximumf>, %56, %cst_16 [2] : vector<8x8x8xf32> to vector<8x8xf32>
    %58 = vector.shape_cast %57 : vector<8x8xf32> to vector<8x8x1xf32>
    %59 = vector.broadcast %58 : vector<8x8x1xf32> to vector<8x8x8xf32>
    %60 = arith.subf %56, %59 : vector<8x8x8xf32>
    %61 = math.exp %60 : vector<8x8x8xf32>
    %cst_17 = arith.constant dense<0.000000e+00> : vector<8x8xf32>
    %62 = vector.multi_reduction <add>, %61, %cst_17 [2] : vector<8x8x8xf32> to vector<8x8xf32>
    %63 = vector.shape_cast %62 : vector<8x8xf32> to vector<8x8x1xf32>
    %64 = vector.broadcast %63 : vector<8x8x1xf32> to vector<8x8x8xf32>
    %65 = arith.divf %61, %64 : vector<8x8x8xf32>
    %66 = arith.truncf %65 : vector<8x8x8xf32> to vector<8x8x8xbf16>
    "tpu.trace_start"() <{level = 10 : i32, message = "bqk,bkd->bqd"}> : () -> ()
    %cst_18 = arith.constant dense<0.000000e+00> : vector<8x8x8xf32>
    %67 = tpu.matmul %66, %55, %cst_18 {dimension_numbers = #tpu.dot_dimension_numbers<[2], [1], [1], [2], [0, 0, 0, 1, 1, 2], [0], [0]>} : vector<8x8x8xbf16>, vector<8x8x8xbf16>, vector<8x8x8xf32> -> vector<8x8x8xf32>
    "tpu.trace_stop"() : () -> ()
    %68 = vector.shape_cast %67 : vector<8x8x8xf32> to vector<64x8xf32>
    %69 = vector.extract_strided_slice %68 {offsets = [0, 0], sizes = [16, 8], strides = [1, 1]} : vector<64x8xf32> to vector<16x8xf32>
    %70 = vector.extract_strided_slice %68 {offsets = [16, 0], sizes = [16, 8], strides = [1, 1]} : vector<64x8xf32> to vector<16x8xf32>
    %71 = vector.extract_strided_slice %68 {offsets = [32, 0], sizes = [16, 8], strides = [1, 1]} : vector<64x8xf32> to vector<16x8xf32>
    %72 = vector.extract_strided_slice %68 {offsets = [48, 0], sizes = [16, 8], strides = [1, 1]} : vector<64x8xf32> to vector<16x8xf32>
    %73 = tpu.concatenate %69, %70, %71, %72 in 1 : vector<16x8xf32>, vector<16x8xf32>, vector<16x8xf32>, vector<16x8xf32> -> vector<16x32xf32>
    %74 = arith.truncf %73 : vector<16x32xf32> to vector<16x32xbf16>
    %c0_19 = arith.constant 0 : index
    %c0_20 = arith.constant 0 : index
    %75 = vector.load %arg6[%c0_19, %c0_20] : memref<32x32xbf16, #tpu.memory_space<vmem>>, vector<32x32xbf16>
    %cst_21 = arith.constant dense<0.000000e+00> : vector<16x32xf32>
    %76 = tpu.matmul %74, %75, %cst_21 {dimension_numbers = #tpu.dot_dimension_numbers<[1], [0], [0], [1], [0, 0, 1, 1], [], []>} : vector<16x32xbf16>, vector<32x32xbf16>, vector<16x32xf32> -> vector<16x32xf32>
    %c0_22 = arith.constant 0 : index
    %c0_23 = arith.constant 0 : index
    %77 = vector.load %arg7[%c0_22, %c0_23] : memref<1x32xf32, #tpu.memory_space<vmem>>, vector<1x32xf32>
    %78 = vector.broadcast %77 : vector<1x32xf32> to vector<16x32xf32>
    %79 = arith.addf %76, %78 : vector<16x32xf32>
    %80 = arith.addf %1, %79 : vector<16x32xf32>
    %cst_24 = arith.constant dense<0.000000e+00> : vector<16xf32>
    %81 = vector.multi_reduction <add>, %80, %cst_24 [1] : vector<16x32xf32> to vector<16xf32>
    %82 = vector.shape_cast %81 : vector<16xf32> to vector<16x1xf32>
    %cst_25 = arith.constant 3.200000e+01 : f32
    %83 = vector.broadcast %cst_25 : f32 to vector<16x1xf32>
    %84 = arith.divf %82, %83 : vector<16x1xf32>
    %85 = vector.broadcast %84 : vector<16x1xf32> to vector<16x32xf32>
    %86 = arith.subf %80, %85 : vector<16x32xf32>
    %87 = arith.mulf %86, %86 : vector<16x32xf32>
    %cst_26 = arith.constant dense<0.000000e+00> : vector<16xf32>
    %88 = vector.multi_reduction <add>, %87, %cst_26 [1] : vector<16x32xf32> to vector<16xf32>
    %89 = vector.shape_cast %88 : vector<16xf32> to vector<16x1xf32>
    %cst_27 = arith.constant 3.200000e+01 : f32
    %90 = vector.broadcast %cst_27 : f32 to vector<16x1xf32>
    %91 = arith.divf %89, %90 : vector<16x1xf32>
    %92 = vector.broadcast %84 : vector<16x1xf32> to vector<16x32xf32>
    %93 = arith.subf %80, %92 : vector<16x32xf32>
    %cst_28 = arith.constant 9.99999997E-7 : f32
    %94 = vector.broadcast %cst_28 : f32 to vector<16x1xf32>
    %95 = arith.addf %91, %94 : vector<16x1xf32>
    %96 = math.rsqrt %95 : vector<16x1xf32>
    %97 = vector.broadcast %96 : vector<16x1xf32> to vector<16x32xf32>
    %98 = arith.mulf %93, %97 : vector<16x32xf32>
    %c0_29 = arith.constant 0 : index
    %c0_30 = arith.constant 0 : index
    %99 = vector.load %arg8[%c0_29, %c0_30] : memref<1x32xf32, #tpu.memory_space<vmem>>, vector<1x32xf32>
    %100 = vector.broadcast %99 : vector<1x32xf32> to vector<16x32xf32>
    %101 = arith.mulf %98, %100 : vector<16x32xf32>
    %c0_31 = arith.constant 0 : index
    %c0_32 = arith.constant 0 : index
    %102 = vector.load %arg9[%c0_31, %c0_32] : memref<1x32xf32, #tpu.memory_space<vmem>>, vector<1x32xf32>
    %103 = vector.broadcast %102 : vector<1x32xf32> to vector<16x32xf32>
    %104 = arith.addf %101, %103 : vector<16x32xf32>
    %105 = arith.truncf %104 : vector<16x32xf32> to vector<16x32xbf16>
    %c0_33 = arith.constant 0 : index
    %c0_34 = arith.constant 0 : index
    %106 = vector.load %arg10[%c0_33, %c0_34] : memref<32x64xbf16, #tpu.memory_space<vmem>>, vector<32x64xbf16>
    %cst_35 = arith.constant dense<0.000000e+00> : vector<16x64xf32>
    %107 = tpu.matmul %105, %106, %cst_35 {dimension_numbers = #tpu.dot_dimension_numbers<[1], [0], [0], [1], [0, 0, 1, 1], [], []>} : vector<16x32xbf16>, vector<32x64xbf16>, vector<16x64xf32> -> vector<16x64xf32>
    %c0_36 = arith.constant 0 : index
    %c0_37 = arith.constant 0 : index
    %108 = vector.load %arg11[%c0_36, %c0_37] : memref<1x64xf32, #tpu.memory_space<vmem>>, vector<1x64xf32>
    %109 = vector.broadcast %108 : vector<1x64xf32> to vector<16x64xf32>
    %110 = arith.addf %107, %109 : vector<16x64xf32>
    %cst_38 = arith.constant 0.000000e+00 : f32
    %111 = vector.broadcast %cst_38 : f32 to vector<16x64xf32>
    %112 = arith.maximumf %110, %111 : vector<16x64xf32>
    %113 = arith.truncf %112 : vector<16x64xf32> to vector<16x64xbf16>
    %c0_39 = arith.constant 0 : index
    %c0_40 = arith.constant 0 : index
    %114 = vector.load %arg12[%c0_39, %c0_40] : memref<64x32xbf16, #tpu.memory_space<vmem>>, vector<64x32xbf16>
    %cst_41 = arith.constant dense<0.000000e+00> : vector<16x32xf32>
    %115 = tpu.matmul %113, %114, %cst_41 {dimension_numbers = #tpu.dot_dimension_numbers<[1], [0], [0], [1], [0, 0, 1, 1], [], []>} : vector<16x64xbf16>, vector<64x32xbf16>, vector<16x32xf32> -> vector<16x32xf32>
    %c0_42 = arith.constant 0 : index
    %c0_43 = arith.constant 0 : index
    %116 = vector.load %arg13[%c0_42, %c0_43] : memref<1x32xf32, #tpu.memory_space<vmem>>, vector<1x32xf32>
    %117 = vector.broadcast %116 : vector<1x32xf32> to vector<16x32xf32>
    %118 = arith.addf %115, %117 : vector<16x32xf32>
    %119 = arith.addf %80, %118 : vector<16x32xf32>
    %120 = vector.shape_cast %119 : vector<16x32xf32> to vector<2x8x32xf32>
    %c0_44 = arith.constant 0 : index
    %c0_45 = arith.constant 0 : index
    %c0_46 = arith.constant 0 : index
    %121 = vector.load %arg14[%c0_44, %c0_45, %c0_46] : memref<2x8x32xf32, #tpu.memory_space<vmem>>, vector<2x8x32xf32>
    tpu.vector_store %arg14[%c0_44, %c0_45, %c0_46], %120 {strides = array<i32>} : memref<2x8x32xf32, #tpu.memory_space<vmem>>, vector<2x8x32xf32>,
    return
  }
  func.func @transform_0(%arg0: i32) -> (i32, i32, i32) {
    %c0_i32 = arith.constant 0 : i32
    %c0_i32_0 = arith.constant 0 : i32
    %c0_i32_1 = arith.constant 0 : i32
    return %arg0, %c0_i32, %c0_i32_0 : i32, i32, i32
  }
  func.func @transform_1(%arg0: i32) -> (i32, i32) {
    %c0_i32 = arith.constant 0 : i32
    %c0_i32_0 = arith.constant 0 : i32
    %c0_i32_1 = arith.constant 0 : i32
    return %c0_i32, %c0_i32_0 : i32, i32
  }
  func.func @transform_2(%arg0: i32) -> (i32, i32) {
    %c0_i32 = arith.constant 0 : i32
    %c0_i32_0 = arith.constant 0 : i32
    %c0_i32_1 = arith.constant 0 : i32
    return %c0_i32, %c0_i32_0 : i32, i32
  }
  func.func @transform_3(%arg0: i32) -> (i32, i32) {
    %c0_i32 = arith.constant 0 : i32
    %c0_i32_0 = arith.constant 0 : i32
    %c0_i32_1 = arith.constant 0 : i32
    return %c0_i32, %c0_i32_0 : i32, i32
  }
  func.func @transform_4(%arg0: i32) -> (i32, i32) {
    %c0_i32 = arith.constant 0 : i32
    %c0_i32_0 = arith.constant 0 : i32
    %c0_i32_1 = arith.constant 0 : i32
    return %c0_i32, %c0_i32_0 : i32, i32
  }
  func.func @transform_5(%arg0: i32) -> (i32, i32) {
    %c0_i32 = arith.constant 0 : i32
    %c0_i32_0 = arith.constant 0 : i32
    %c0_i32_1 = arith.constant 0 : i32
    return %c0_i32, %c0_i32_0 : i32, i32
  }
  func.func @transform_6(%arg0: i32) -> (i32, i32) {
    %c0_i32 = arith.constant 0 : i32
    %c0_i32_0 = arith.constant 0 : i32
    %c0_i32_1 = arith.constant 0 : i32
    return %c0_i32, %c0_i32_0 : i32, i32
  }
  func.func @transform_7(%arg0: i32) -> (i32, i32) {
    %c0_i32 = arith.constant 0 : i32
    %c0_i32_0 = arith.constant 0 : i32
    %c0_i32_1 = arith.constant 0 : i32
    return %c0_i32, %c0_i32_0 : i32, i32
  }
  func.func @transform_8(%arg0: i32) -> (i32, i32) {
    %c0_i32 = arith.constant 0 : i32
    %c0_i32_0 = arith.constant 0 : i32
    %c0_i32_1 = arith.constant 0 : i32
    return %c0_i32, %c0_i32_0 : i32, i32
  }
  func.func @transform_9(%arg0: i32) -> (i32, i32) {
    %c0_i32 = arith.constant 0 : i32
    %c0_i32_0 = arith.constant 0 : i32
    %c0_i32_1 = arith.constant 0 : i32
    return %c0_i32, %c0_i32_0 : i32, i32
  }
  func.func @transform_10(%arg0: i32) -> (i32, i32) {
    %c0_i32 = arith.constant 0 : i32
    %c0_i32_0 = arith.constant 0 : i32
    %c0_i32_1 = arith.constant 0 : i32
    return %c0_i32, %c0_i32_0 : i32, i32
  }
  func.func @transform_11(%arg0: i32) -> (i32, i32) {
    %c0_i32 = arith.constant 0 : i32
    %c0_i32_0 = arith.constant 0 : i32
    %c0_i32_1 = arith.constant 0 : i32
    return %c0_i32, %c0_i32_0 : i32, i32
  }
  func.func @transform_12(%arg0: i32) -> (i32, i32) {
    %c0_i32 = arith.constant 0 : i32
    %c0_i32_0 = arith.constant 0 : i32
    %c0_i32_1 = arith.constant 0 : i32
    return %c0_i32, %c0_i32_0 : i32, i32
  }
  func.func @transform_13(%arg0: i32) -> (i32, i32, i32) {
    %c0_i32 = arith.constant 0 : i32
    %c0_i32_0 = arith.constant 0 : i32
    %c0_i32_1 = arith.constant 0 : i32
    return %arg0, %c0_i32, %c0_i32_0 : i32, i32, i32
  }
}

</mosaic_0001>

<llo_original>
// kernel: tpu_custom_call.1
$region0: #{tpu_custom_call.1}
  #allocation0 [shape = 'u32[]', space=smem, size = 0x4, offset = 0x4, fixed_abs, tag = 'smem constant byte address 0x4 - core index']
  #allocation1 [shape = 'u32[144,128]{1,0:T(1,128)}', space=vmem, size = 0x12000, scoped, tag = 'internal scratch']
  %s0 = inlined_call_operand.vmem [shape: f32[2,8,32], index: 0, kind: input, shape index: {}]
  %s1 = inlined_call_operand.vmem [shape: f32[1,32], index: 1, kind: input, shape index: {}]
  %s2 = inlined_call_operand.vmem [shape: f32[1,32], index: 2, kind: input, shape index: {}]
  %s3 = inlined_call_operand.vmem [shape: bf16[32,96], index: 3, kind: input, shape index: {}]
  %s4 = inlined_call_operand.vmem [shape: f32[1,96], index: 4, kind: input, shape index: {}]
  %s5 = inlined_call_operand.vmem [shape: bf16[32,32], index: 5, kind: input, shape index: {}]
  %s6 = inlined_call_operand.vmem [shape: f32[1,32], index: 6, kind: input, shape index: {}]
  %s7 = inlined_call_operand.hbm [shape: f32[1,32], index: 7, kind: input, shape index: {}]
  %s8 = inlined_call_operand.hbm [shape: f32[1,32], index: 8, kind: input, shape index: {}]
  %s9 = inlined_call_operand.hbm [shape: bf16[32,64], index: 9, kind: input, shape index: {}]
  %s10 = inlined_call_operand.hbm [shape: f32[1,64], index: 10, kind: input, shape index: {}]
  %s11 = inlined_call_operand.vmem [shape: bf16[64,32], index: 11, kind: input, shape index: {}]
  %s12 = inlined_call_operand.vmem [shape: f32[1,32], index: 12, kind: input, shape index: {}]
  %s13 = inlined_call_operand.hbm [shape: f32[2,8,32], index: 13, kind: output, shape index: {}]
  %s14 = sld [smem:[#allocation0]]
  $region78: #{tpu_custom_call.1} parent=0
    _
  %s16 = ssub.s32 1, %s14
  %s17 = scalar_select 0, %s16, %s14
  $region1: #{tpu_custom_call.1} parent=0
    #allocation2 [shape = 'u8[512]{0}', space=vmem, size = 0x400, scoped, tag = 'input window, operand 7, single buffered']
    #allocation3 [shape = 's32[1]{0}', space=sflag, size = 0x4, scoped, tag = 'scoped memory for tpu_custom_call.1']
    #allocation4 [shape = 's32[1]{0}', space=sflag, size = 0x4, scoped, tag = 'scoped memory for tpu_custom_call.1']
    #allocation5 [shape = 'u8[512]{0}', space=vmem, size = 0x400, scoped, tag = 'input window, operand 8, single buffered']
    #allocation6 [shape = 's32[1]{0}', space=sflag, size = 0x4, scoped, tag = 'scoped memory for tpu_custom_call.1']
    #allocation7 [shape = 'u8[8192]{0}', space=vmem, size = 0x2000, scoped, tag = 'input window, operand 9, single buffered']
    #allocation8 [shape = 'u8[512]{0}', space=vmem, size = 0x400, scoped, tag = 'input window, operand 10, single buffered']
    #allocation9 [shape = 's32[1]{0}', space=sflag, size = 0x4, scoped, tag = 'scoped memory for tpu_custom_call.1']
    #allocation10 [shape = 'u8[8192]{0}', space=vmem, size = 0x2000, scoped, tag = 'output window, operand 0, single buffered']
    %18 = vsyncpa [#allocation3], 0
    %19 = vsyncpa [#allocation6], 0
    %20 = vsyncpa [#allocation9], 0
    %21 = vsyncpa [#allocation4], 0
    // Predicated region
    $region2: #{tpu_custom_call.1} parent=1 // pred_check
      _
    $region3: #{tpu_custom_call.1} parent=1 // pred_check_branch
      %23 = sbr.rel (0) target = $region5
    $region4: #{tpu_custom_call.1} parent=1 // pred_region
      _
    $region5: #{tpu_custom_call.1} parent=1 // pred_fallthru
      _
    // Predicated region
    $region6: #{tpu_custom_call.1} parent=1 // pred_check
      _
    $region7: #{tpu_custom_call.1} parent=1 // pred_check_branch
      %25 = sbr.rel (0) target = $region9
    $region8: #{tpu_custom_call.1} parent=1 // pred_region
      _
    $region9: #{tpu_custom_call.1} parent=1 // pred_fallthru
      _
    // Predicated region
    $region10: #{tpu_custom_call.1} parent=1 // pred_check
      _
    $region11: #{tpu_custom_call.1} parent=1 // pred_check_branch
      %27 = sbr.rel (0) target = $region13
    $region12: #{tpu_custom_call.1} parent=1 // pred_region
      _
    $region13: #{tpu_custom_call.1} parent=1 // pred_fallthru
      _
    // Predicated region
    $region14: #{tpu_custom_call.1} parent=1 // pred_check
      _
    $region15: #{tpu_custom_call.1} parent=1 // pred_check_branch
      %29 = sbr.rel (0) target = $region17
    $region16: #{tpu_custom_call.1} parent=1 // pred_region
      _
    $region17: #{tpu_custom_call.1} parent=1 // pred_fallthru
      _
    // Predicated region
    $region18: #{tpu_custom_call.1} parent=1 // pred_check
      _
    $region19: #{tpu_custom_call.1} parent=1 // pred_check_branch
      %31 = sbr.rel (0) target = $region21
    $region20: #{tpu_custom_call.1} parent=1 // pred_region
      _
    $region21: #{tpu_custom_call.1} parent=1 // pred_fallthru
      _
    // Predicated region
    $region22: #{tpu_custom_call.1} parent=1 // pred_check
      _
    $region23: #{tpu_custom_call.1} parent=1 // pred_check_branch
      %33 = sbr.rel (0) target = $region25
    $region24: #{tpu_custom_call.1} parent=1 // pred_region
      _
    $region25: #{tpu_custom_call.1} parent=1 // pred_fallthru
      _
    // Predicated region
    $region26: #{tpu_custom_call.1} parent=1 // pred_check
      _
    $region27: #{tpu_custom_call.1} parent=1 // pred_check_branch
      %35 = sbr.rel (0) target = $region29
    $region28: #{tpu_custom_call.1} parent=1 // pred_region
      _
    $region29: #{tpu_custom_call.1} parent=1 // pred_fallthru
      _
    // Predicated region
    $region30: #{tpu_custom_call.1} parent=1 // pred_check
      _
    $region31: #{tpu_custom_call.1} parent=1 // pred_check_branch
      %37 = sbr.rel (0) target = $region33
    $region32: #{tpu_custom_call.1} parent=1 // pred_region
      %s39 = ssub.s32 16, 16
      %40 = vsyncadd [#allocation3], %s39
      %s42 = sshll.u32 [#allocation2], 4
      %s43 = int_to_ptr.vmem [resolvable:$true] %s42
      %45 = dma.hbm_to_vmem [thread:$0]  %s7, 16, %s43, [#allocation3]
    $region33: #{tpu_custom_call.1} parent=1 // pred_fallthru
      _
    // Predicated region
    $region34: #{tpu_custom_call.1} parent=1 // pred_check
      _
    $region35: #{tpu_custom_call.1} parent=1 // pred_check_branch
      %47 = sbr.rel (0) target = $region37
    $region36: #{tpu_custom_call.1} parent=1 // pred_region
      %s49 = ssub.s32 16, 16
      %50 = vsyncadd [#allocation6], %s49
      %s52 = sshll.u32 [#allocation5], 4
      %s53 = int_to_ptr.vmem [resolvable:$true] %s52
      %55 = dma.hbm_to_vmem [thread:$0]  %s8, 16, %s53, [#allocation6]
    $region37: #{tpu_custom_call.1} parent=1 // pred_fallthru
      _
    // Predicated region
    $region38: #{tpu_custom_call.1} parent=1 // pred_check
      _
    $region39: #{tpu_custom_call.1} parent=1 // pred_check_branch
      %57 = sbr.rel (0) target = $region41
    $region40: #{tpu_custom_call.1} parent=1 // pred_region
      %s59 = ssub.s32 256, 256
      %60 = vsyncadd [#allocation6], %s59
      %s61 = sshll.u32 [#allocation7], 4
      %s62 = int_to_ptr.vmem [resolvable:$true] %s61
      %67 = dma.hbm_to_vmem [thread:$0]  %s9, 256, %s62, [#allocation6], 64, 64, 4
    $region41: #{tpu_custom_call.1} parent=1 // pred_fallthru
      _
    // Predicated region
    $region42: #{tpu_custom_call.1} parent=1 // pred_check
      _
    $region43: #{tpu_custom_call.1} parent=1 // pred_check_branch
      %69 = sbr.rel (0) target = $region45
    $region44: #{tpu_custom_call.1} parent=1 // pred_region
      %s71 = ssub.s32 16, 16
      %72 = vsyncadd [#allocation9], %s71
      %s74 = sshll.u32 [#allocation8], 4
      %s75 = int_to_ptr.vmem [resolvable:$true] %s74
      %77 = dma.hbm_to_vmem [thread:$0]  %s10, 16, %s75, [#allocation9]
    $region45: #{tpu_custom_call.1} parent=1 // pred_fallthru
      _
    // Predicated region
    $region46: #{tpu_custom_call.1} parent=1 // pred_check
      _
    $region47: #{tpu_custom_call.1} parent=1 // pred_check_branch
      %79 = sbr.rel (0) target = $region49
    $region48: #{tpu_custom_call.1} parent=1 // pred_region
      _
    $region49: #{tpu_custom_call.1} parent=1 // pred_fallthru
      _
    // Predicated region
    $region50: #{tpu_custom_call.1} parent=1 // pred_check
      _
    $region51: #{tpu_custom_call.1} parent=1 // pred_check_branch
      %81 = sbr.rel (0) target = $region53
    $region52: #{tpu_custom_call.1} parent=1 // pred_region
      _
    $region53: #{tpu_custom_call.1} parent=1 // pred_fallthru
      _
    // Predicated region
    $region54: #{tpu_custom_call.1} parent=1 // pred_check
      _
    $region55: #{tpu_custom_call.1} parent=1 // pred_check_branch
      %83 = sbr.rel (0) target = $region57
    $region56: #{tpu_custom_call.1} parent=1 // pred_region
      %84 = dma.done [#allocation3], 16
    $region57: #{tpu_custom_call.1} parent=1 // pred_fallthru
      _
    // Predicated region
    $region58: #{tpu_custom_call.1} parent=1 // pred_check
      _
    $region59: #{tpu_custom_call.1} parent=1 // pred_check_branch
      %86 = sbr.rel (0) target = $region61
    $region60: #{tpu_custom_call.1} parent=1 // pred_region
      %87 = dma.done [#allocation6], 16
    $region61: #{tpu_custom_call.1} parent=1 // pred_fallthru
      _
    // Predicated region
    $region62: #{tpu_custom_call.1} parent=1 // pred_check
      _
    $region63: #{tpu_custom_call.1} parent=1 // pred_check_branch
      %89 = sbr.rel (0) target = $region65
    $region64: #{tpu_custom_call.1} parent=1 // pred_region
      %90 = dma.done [#allocation6], 256
    $region65: #{tpu_custom_call.1} parent=1 // pred_fallthru
      _
    // Predicated region
    $region66: #{tpu_custom_call.1} parent=1 // pred_check
      _
    $region67: #{tpu_custom_call.1} parent=1 // pred_check_branch
      %92 = sbr.rel (0) target = $region69
    $region68: #{tpu_custom_call.1} parent=1 // pred_region
      %93 = dma.done [#allocation9], 16
    $region69: #{tpu_custom_call.1} parent=1 // pred_fallthru
      _
    %v95 = vld [vmem:[%s0] sm:$0xff]
    %v96 = vld [vmem:[%s0 + $0x8] sm:$0xff]
    %vm97 = vcmask 261120
    %v98 = vsel %vm97, %v95, 0.0
    %99 = vadd.xlane.f32.xlu0 %v98
    %v100 = vpop.xlane.xlu0 %99
    %v101 = vsel %vm97, %v96, 0.0
    %102 = vadd.xlane.f32.xlu0 %v101
    %v103 = vpop.xlane.xlu0 %102
    %v104 = vrcp.pop 32.0
    %v105 = vmul.f32 %v100, %v104
    %v106 = vmul.f32 %v103, %v104
    %v107 = vsub.f32 %v95, %v105
    %v108 = vsub.f32 %v96, %v106
    %v109 = vmul.f32 %v107, %v107
    %v110 = vmul.f32 %v108, %v108
    %v111 = vsel %vm97, %v109, 0.0
    %112 = vadd.xlane.f32.xlu0 %v111
    %v113 = vpop.xlane.xlu0 %112
    %v114 = vsel %vm97, %v110, 0.0
    %115 = vadd.xlane.f32.xlu0 %v114
    %v116 = vpop.xlane.xlu0 %115
    %v117 = vmul.f32 %v113, %v104
    %v118 = vmul.f32 %v116, %v104
    %v119 = vadd.f32 %v117, 1e-06
    %v120 = vadd.f32 %v118, 1e-06
    %v121 = vrsqrt.pop %v119
    %v122 = vrsqrt.pop %v120
    %v123 = vmul.f32 %v107, %v121
    %v124 = vmul.f32 %v108, %v122
    %v125 = vld [vmem:[%s1] sm:$0x1]
    %v127 = vlaneseq
    %v128 = vshrl.u32 %v127, 7
    %v129 = vsub.s32 0, %v128
    %v130 = vrot.slane %v125, %v129
    %v132 = vmul.f32 %v123, %v130
    %v133 = vmul.f32 %v124, %v130
    %v134 = vld [vmem:[%s2] sm:$0x1]
    %v136 = vlaneseq
    %v137 = vshrl.u32 %v136, 7
    %v138 = vsub.s32 0, %v137
    %v139 = vrot.slane %v134, %v138
    %v141 = vadd.f32 %v132, %v139
    %v142 = vadd.f32 %v133, %v139
    %v143 = vpack.c.bf16 %v142, %v141
    %v144 = vld [vmem:[%s3] sm:$0xf]
    %v145 = vld [vmem:[%s3 + $0x4] sm:$0xf]
    %v146 = vld [vmem:[%s3 + $0x8] sm:$0xf]
    %v147 = vld [vmem:[%s3 + $0xc] sm:$0xf]
    %v148 = vld [vmem:[%s4] sm:$0x1]
    %v150 = vlaneseq
    %v151 = vshrl.u32 %v150, 7
    %v152 = vsub.s32 0, %v151
    %v153 = vrot.slane %v148, %v152
    %v159 = vunpack.c.l.b16 %v144
    %v160 = vunpack.c.l.b16 %v145
    %v161 = vunpack.c.l.b16 %v146
    %v162 = vunpack.c.l.b16 %v147
    %v163 = vpack.c.b16 %v160, %v159
    %v164 = vpack.c.b16 %v162, %v161
    %v168 = vsel %vm97, %v143, 0
    %170 = vmatprep.subr.bf16.mxu0 0
    %171 = vmatpush1.bf16.msra.mxu0 0
    %172 = vmatprep.subr.bf16.mxu0 0
    %173 = vmatpush1.bf16.msra.mxu0 0
    %174 = vmatprep.subr.bf16.mxu0 0
    %175 = vmatpush1.bf16.msra.mxu0 0
    %176 = vmatprep.subr.bf16.mxu0 0
    %177 = vmatpush1.bf16.msra.mxu0 0
    %178 = vmatprep.subr.bf16.mxu0 0
    %179 = vmatpush1.bf16.msra.mxu0 0
    %180 = vmatprep.subr.bf16.mxu0 0
    %181 = vmatpush1.bf16.msra.mxu0 0
    %182 = vmatprep.subr.bf16.mxu0 0
    %183 = vmatpush1.bf16.msra.mxu0 %v164
    %184 = vmatprep.subr.bf16.mxu0 0
    %185 = vmatpush1.bf16.msra.mxu0 %v163
    %186 = vmatprep.subr.bf16.mxu0 0
    %187 = vmatpush2.bf16.msra.mxu0 0
    %188 = vmatprep.subr.bf16.mxu0 0
    %189 = vmatpush2.bf16.msra.mxu0 0
    %190 = vmatprep.subr.bf16.mxu0 0
    %191 = vmatpush2.bf16.msra.mxu0 0
    %192 = vmatprep.subr.bf16.mxu0 0
    %193 = vmatpush2.bf16.msra.mxu0 0
    %194 = vmatprep.subr.bf16.mxu0 0
    %195 = vmatpush2.bf16.msra.mxu0 0
    %196 = vmatprep.subr.bf16.mxu0 0
    %197 = vmatpush2.bf16.msra.mxu0 0
    %198 = vmatprep.subr.bf16.mxu0 0
    %199 = vmatpush2.bf16.msra.mxu0 0
    %200 = vmatprep.subr.bf16.mxu0 0
    %201 = vmatpush2.bf16.msra.mxu0 0
    %202 = vmatprep.mubr.bf16.mxu0 0
    %203 = vmatmul.mubr.bf16.gmra.mxu0 %v168
    %v204 = vpop.f32.mrf.mxu0
    %v205 = vadd.f32 %v153, %v204
    %v206 = vpop.f32.mrf.mxu0
    %v207 = vpop.f32.mrf.mxu0
    %v208 = vadd.f32 %v153, %v207
    %v209 = vpop.f32.mrf.mxu0
    %210 = vdwg.mxu0
    %213 = vrot.lane.b32.xlu0 %v205, 120
    %v214 = vpop.permute.xlu0 %213
    %215 = vrot.lane.b32.xlu0 %v208, 120
    %v216 = vpop.permute.xlu0 %215
    %219 = vrot.lane.b32.xlu0 %v205, 112
    %v220 = vpop.permute.xlu0 %219
    %221 = vrot.lane.b32.xlu0 %v208, 112
    %v222 = vpop.permute.xlu0 %221
    %225 = vrot.lane.b32.xlu0 %v205, 104
    %v226 = vpop.permute.xlu0 %225
    %227 = vrot.lane.b32.xlu0 %v208, 104
    %v228 = vpop.permute.xlu0 %227
    %v231 = vpack.c.bf16 %v205, %v205
    %v232 = vpack.c.bf16 %v208, %v208
    %v233 = vpack.c.bf16 %v214, %v214
    %v234 = vpack.c.bf16 %v216, %v216
    %v235 = vpack.c.bf16 %v220, %v220
    %v236 = vpack.c.bf16 %v222, %v222
    %v237 = vpack.c.bf16 %v226, %v226
    %v238 = vpack.c.bf16 %v228, %v228
    %240 = vrot.lane.b32.xlu0 %v231, 96
    %v241 = vpop.permute.xlu0 %240
    %vm242 = vcmask 64512
    %v244 = vsel %vm242, %v231, 0
    %v247 = vsel %vm242, %v241, 0
    %249 = vmatprep.subr.bf16.mxu0 0
    %250 = vmatpush1.bf16.xpose.msra.mxu0 0
    %251 = vmatprep.subr.bf16.mxu0 0
    %252 = vmatpush1.bf16.xpose.msra.mxu0 0
    %253 = vmatprep.subr.bf16.mxu0 0
    %254 = vmatpush1.bf16.xpose.msra.mxu0 0
    %255 = vmatprep.subr.bf16.mxu0 0
    %256 = vmatpush1.bf16.xpose.msra.mxu0 0
    %257 = vmatprep.subr.bf16.mxu0 0
    %258 = vmatpush1.bf16.xpose.msra.mxu0 0
    %259 = vmatprep.subr.bf16.mxu0 0
    %260 = vmatpush1.bf16.xpose.msra.mxu0 0
    %261 = vmatprep.subr.bf16.mxu0 0
    %262 = vmatpush1.bf16.xpose.msra.mxu0 0
    %263 = vmatprep.subr.bf16.mxu0 0
    %264 = vmatpush1.bf16.xpose.msra.mxu0 %v247
    %265 = vmatprep.subr.bf16.mxu0 0
    %266 = vmatpush2.bf16.xpose.msra.mxu0 0
    %267 = vmatprep.subr.bf16.mxu0 0
    %268 = vmatpush2.bf16.xpose.msra.mxu0 0
    %269 = vmatprep.subr.bf16.mxu0 0
    %270 = vmatpush2.bf16.xpose.msra.mxu0 0
    %271 = vmatprep.subr.bf16.mxu0 0
    %272 = vmatpush2.bf16.xpose.msra.mxu0 0
    %273 = vmatprep.subr.bf16.mxu0 0
    %274 = vmatpush2.bf16.xpose.msra.mxu0 0
    %275 = vmatprep.subr.bf16.mxu0 0
    %276 = vmatpush2.bf16.xpose.msra.mxu0 0
    %277 = vmatprep.subr.bf16.mxu0 0
    %278 = vmatpush2.bf16.xpose.msra.mxu0 0
    %279 = vmatprep.subr.bf16.mxu0 0
    %280 = vmatpush2.bf16.xpose.msra.mxu0 0
    %281 = vmatprep.mubr.bf16.mxu0 0
    %282 = vmatmul.mubr.bf16.gmra.mxu0 %v244
    %v283 = vpop.f32.mrf.mxu0
    %v284 = vadd.f32 0.0, %v283
    %v285 = vpop.f32.mrf.mxu0
    %v286 = vpop.f32.mrf.mxu0
    %v287 = vpop.f32.mrf.mxu0
    %288 = vdwg.mxu0
    %290 = vrot.lane.b32.xlu0 %v232, 96
    %v291 = vpop.permute.xlu0 %290
    %v293 = vsel %vm242, %v232, 0
    %v296 = vsel %vm242, %v291, 0
    %298 = vmatprep.subr.bf16.mxu0 0
    %299 = vmatpush1.bf16.xpose.msra.mxu0 0
    %300 = vmatprep.subr.bf16.mxu0 0
    %301 = vmatpush1.bf16.xpose.msra.mxu0 0
    %302 = vmatprep.subr.bf16.mxu0 0
    %303 = vmatpush1.bf16.xpose.msra.mxu0 0
    %304 = vmatprep.subr.bf16.mxu0 0
    %305 = vmatpush1.bf16.xpose.msra.mxu0 0
    %306 = vmatprep.subr.bf16.mxu0 0
    %307 = vmatpush1.bf16.xpose.msra.mxu0 0
    %308 = vmatprep.subr.bf16.mxu0 0
    %309 = vmatpush1.bf16.xpose.msra.mxu0 0
    %310 = vmatprep.subr.bf16.mxu0 0
    %311 = vmatpush1.bf16.xpose.msra.mxu0 0
    %312 = vmatprep.subr.bf16.mxu0 0
    %313 = vmatpush1.bf16.xpose.msra.mxu0 %v296
    %314 = vmatprep.subr.bf16.mxu0 0
    %315 = vmatpush2.bf16.xpose.msra.mxu0 0
    %316 = vmatprep.subr.bf16.mxu0 0
    %317 = vmatpush2.bf16.xpose.msra.mxu0 0
    %318 = vmatprep.subr.bf16.mxu0 0
    %319 = vmatpush2.bf16.xpose.msra.mxu0 0
    %320 = vmatprep.subr.bf16.mxu0 0
    %321 = vmatpush2.bf16.xpose.msra.mxu0 0
    %322 = vmatprep.subr.bf16.mxu0 0
    %323 = vmatpush2.bf16.xpose.msra.mxu0 0
    %324 = vmatprep.subr.bf16.mxu0 0
    %325 = vmatpush2.bf16.xpose.msra.mxu0 0
    %326 = vmatprep.subr.bf16.mxu0 0
    %327 = vmatpush2.bf16.xpose.msra.mxu0 0
    %328 = vmatprep.subr.bf16.mxu0 0
    %329 = vmatpush2.bf16.xpose.msra.mxu0 0
    %330 = vmatprep.mubr.bf16.mxu0 0
    %331 = vmatmul.mubr.bf16.gmra.mxu0 %v293
    %v332 = vpop.f32.mrf.mxu0
    %v333 = vadd.f32 0.0, %v332
    %v334 = vpop.f32.mrf.mxu0
    %v335 = vpop.f32.mrf.mxu0
    %v336 = vpop.f32.mrf.mxu0
    %337 = vdwg.mxu0
    %339 = vrot.lane.b32.xlu0 %v233, 96
    %v340 = vpop.permute.xlu0 %339
    %v342 = vsel %vm242, %v233, 0
    %v345 = vsel %vm242, %v340, 0
    %347 = vmatprep.subr.bf16.mxu0 0
    %348 = vmatpush1.bf16.xpose.msra.mxu0 0
    %349 = vmatprep.subr.bf16.mxu0 0
    %350 = vmatpush1.bf16.xpose.msra.mxu0 0
    %351 = vmatprep.subr.bf16.mxu0 0
    %352 = vmatpush1.bf16.xpose.msra.mxu0 0
    %353 = vmatprep.subr.bf16.mxu0 0
    %354 = vmatpush1.bf16.xpose.msra.mxu0 0
    %355 = vmatprep.subr.bf16.mxu0 0
    %356 = vmatpush1.bf16.xpose.msra.mxu0 0
    %357 = vmatprep.subr.bf16.mxu0 0
    %358 = vmatpush1.bf16.xpose.msra.mxu0 0
    %359 = vmatprep.subr.bf16.mxu0 0
    %360 = vmatpush1.bf16.xpose.msra.mxu0 0
    %361 = vmatprep.subr.bf16.mxu0 0
    %362 = vmatpush1.bf16.xpose.msra.mxu0 %v345
    %363 = vmatprep.subr.bf16.mxu0 0
    %364 = vmatpush2.bf16.xpose.msra.mxu0 0
    %365 = vmatprep.subr.bf16.mxu0 0
    %366 = vmatpush2.bf16.xpose.msra.mxu0 0
    %367 = vmatprep.subr.bf16.mxu0 0
    %368 = vmatpush2.bf16.xpose.msra.mxu0 0
    %369 = vmatprep.subr.bf16.mxu0 0
    %370 = vmatpush2.bf16.xpose.msra.mxu0 0
    %371 = vmatprep.subr.bf16.mxu0 0
    %372 = vmatpush2.bf16.xpose.msra.mxu0 0
    %373 = vmatprep.subr.bf16.mxu0 0
    %374 = vmatpush2.bf16.xpose.msra.mxu0 0
    %375 = vmatprep.subr.bf16.mxu0 0
    %376 = vmatpush2.bf16.xpose.msra.mxu0 0
    %377 = vmatprep.subr.bf16.mxu0 0
    %378 = vmatpush2.bf16.xpose.msra.mxu0 0
    %379 = vmatprep.mubr.bf16.mxu0 0
    %380 = vmatmul.mubr.bf16.gmra.mxu0 %v342
    %v381 = vpop.f32.mrf.mxu0
    %v382 = vadd.f32 0.0, %v381
    %v383 = vpop.f32.mrf.mxu0
    %v384 = vpop.f32.mrf.mxu0
    %v385 = vpop.f32.mrf.mxu0
    %386 = vdwg.mxu0
    %388 = vrot.lane.b32.xlu0 %v234, 96
    %v389 = vpop.permute.xlu0 %388
    %v391 = vsel %vm242, %v234, 0
    %v394 = vsel %vm242, %v389, 0
    %396 = vmatprep.subr.bf16.mxu0 0
    %397 = vmatpush1.bf16.xpose.msra.mxu0 0
    %398 = vmatprep.subr.bf16.mxu0 0
    %399 = vmatpush1.bf16.xpose.msra.mxu0 0
    %400 = vmatprep.subr.bf16.mxu0 0
    %401 = vmatpush1.bf16.xpose.msra.mxu0 0
    %402 = vmatprep.subr.bf16.mxu0 0
    %403 = vmatpush1.bf16.xpose.msra.mxu0 0
    %404 = vmatprep.subr.bf16.mxu0 0
    %405 = vmatpush1.bf16.xpose.msra.mxu0 0
    %406 = vmatprep.subr.bf16.mxu0 0
    %407 = vmatpush1.bf16.xpose.msra.mxu0 0
    %408 = vmatprep.subr.bf16.mxu0 0
    %409 = vmatpush1.bf16.xpose.msra.mxu0 0
    %410 = vmatprep.subr.bf16.mxu0 0
    %411 = vmatpush1.bf16.xpose.msra.mxu0 %v394
    %412 = vmatprep.subr.bf16.mxu0 0
    %413 = vmatpush2.bf16.xpose.msra.mxu0 0
    %414 = vmatprep.subr.bf16.mxu0 0
    %415 = vmatpush2.bf16.xpose.msra.mxu0 0
    %416 = vmatprep.subr.bf16.mxu0 0
    %417 = vmatpush2.bf16.xpose.msra.mxu0 0
    %418 = vmatprep.subr.bf16.mxu0 0
    %419 = vmatpush2.bf16.xpose.msra.mxu0 0
    %420 = vmatprep.subr.bf16.mxu0 0
    %421 = vmatpush2.bf16.xpose.msra.mxu0 0
    %422 = vmatprep.subr.bf16.mxu0 0
    %423 = vmatpush2.bf16.xpose.msra.mxu0 0
    %424 = vmatprep.subr.bf16.mxu0 0
    %425 = vmatpush2.bf16.xpose.msra.mxu0 0
    %426 = vmatprep.subr.bf16.mxu0 0
    %427 = vmatpush2.bf16.xpose.msra.mxu0 0
    %428 = vmatprep.mubr.bf16.mxu0 0
    %429 = vmatmul.mubr.bf16.gmra.mxu0 %v391
    %v430 = vpop.f32.mrf.mxu0
    %v431 = vadd.f32 0.0, %v430
    %v432 = vpop.f32.mrf.mxu0
    %v433 = vpop.f32.mrf.mxu0
    %v434 = vpop.f32.mrf.mxu0
    %435 = vdwg.mxu0
    %437 = vrot.lane.b32.xlu0 %v235, 96
    %v438 = vpop.permute.xlu0 %437
    %v440 = vsel %vm242, %v235, 0
    %v443 = vsel %vm242, %v438, 0
    %445 = vmatprep.subr.bf16.mxu0 0
    %446 = vmatpush1.bf16.xpose.msra.mxu0 0
    %447 = vmatprep.subr.bf16.mxu0 0
    %448 = vmatpush1.bf16.xpose.msra.mxu0 0
    %449 = vmatprep.subr.bf16.mxu0 0
    %450 = vmatpush1.bf16.xpose.msra.mxu0 0
    %451 = vmatprep.subr.bf16.mxu0 0
    %452 = vmatpush1.bf16.xpose.msra.mxu0 0
    %453 = vmatprep.subr.bf16.mxu0 0
    %454 = vmatpush1.bf16.xpose.msra.mxu0 0
    %455 = vmatprep.subr.bf16.mxu0 0
    %456 = vmatpush1.bf16.xpose.msra.mxu0 0
    %457 = vmatprep.subr.bf16.mxu0 0
    %458 = vmatpush1.bf16.xpose.msra.mxu0 0
    %459 = vmatprep.subr.bf16.mxu0 0
    %460 = vmatpush1.bf16.xpose.msra.mxu0 %v443
    %461 = vmatprep.subr.bf16.mxu0 0
    %462 = vmatpush2.bf16.xpose.msra.mxu0 0
    %463 = vmatprep.subr.bf16.mxu0 0
    %464 = vmatpush2.bf16.xpose.msra.mxu0 0
    %465 = vmatprep.subr.bf16.mxu0 0
    %466 = vmatpush2.bf16.xpose.msra.mxu0 0
    %467 = vmatprep.subr.bf16.mxu0 0
    %468 = vmatpush2.bf16.xpose.msra.mxu0 0
    %469 = vmatprep.subr.bf16.mxu0 0
    %470 = vmatpush2.bf16.xpose.msra.mxu0 0
    %471 = vmatprep.subr.bf16.mxu0 0
    %472 = vmatpush2.bf16.xpose.msra.mxu0 0
    %473 = vmatprep.subr.bf16.mxu0 0
    %474 = vmatpush2.bf16.xpose.msra.mxu0 0
    %475 = vmatprep.subr.bf16.mxu0 0
    %476 = vmatpush2.bf16.xpose.msra.mxu0 0
    %477 = vmatprep.mubr.bf16.mxu0 0
    %478 = vmatmul.mubr.bf16.gmra.mxu0 %v440
    %v479 = vpop.f32.mrf.mxu0
    %v480 = vadd.f32 0.0, %v479
    %v481 = vpop.f32.mrf.mxu0
    %v482 = vpop.f32.mrf.mxu0
    %v483 = vpop.f32.mrf.mxu0
    %484 = vdwg.mxu0
    %486 = vrot.lane.b32.xlu0 %v236, 96
    %v487 = vpop.permute.xlu0 %486
    %v489 = vsel %vm242, %v236, 0
    %v492 = vsel %vm242, %v487, 0
    %494 = vmatprep.subr.bf16.mxu0 0
    %495 = vmatpush1.bf16.xpose.msra.mxu0 0
    %496 = vmatprep.subr.bf16.mxu0 0
    %497 = vmatpush1.bf16.xpose.msra.mxu0 0
    %498 = vmatprep.subr.bf16.mxu0 0
    %499 = vmatpush1.bf16.xpose.msra.mxu0 0
    %500 = vmatprep.subr.bf16.mxu0 0
    %501 = vmatpush1.bf16.xpose.msra.mxu0 0
    %502 = vmatprep.subr.bf16.mxu0 0
    %503 = vmatpush1.bf16.xpose.msra.mxu0 0
    %504 = vmatprep.subr.bf16.mxu0 0
    %505 = vmatpush1.bf16.xpose.msra.mxu0 0
    %506 = vmatprep.subr.bf16.mxu0 0
    %507 = vmatpush1.bf16.xpose.msra.mxu0 0
    %508 = vmatprep.subr.bf16.mxu0 0
    %509 = vmatpush1.bf16.xpose.msra.mxu0 %v492
    %510 = vmatprep.subr.bf16.mxu0 0
    %511 = vmatpush2.bf16.xpose.msra.mxu0 0
    %512 = vmatprep.subr.bf16.mxu0 0
    %513 = vmatpush2.bf16.xpose.msra.mxu0 0
    %514 = vmatprep.subr.bf16.mxu0 0
    %515 = vmatpush2.bf16.xpose.msra.mxu0 0
    %516 = vmatprep.subr.bf16.mxu0 0
    %517 = vmatpush2.bf16.xpose.msra.mxu0 0
    %518 = vmatprep.subr.bf16.mxu0 0
    %519 = vmatpush2.bf16.xpose.msra.mxu0 0
    %520 = vmatprep.subr.bf16.mxu0 0
    %521 = vmatpush2.bf16.xpose.msra.mxu0 0
    %522 = vmatprep.subr.bf16.mxu0 0
    %523 = vmatpush2.bf16.xpose.msra.mxu0 0
    %524 = vmatprep.subr.bf16.mxu0 0
    %525 = vmatpush2.bf16.xpose.msra.mxu0 0
    %526 = vmatprep.mubr.bf16.mxu0 0
    %527 = vmatmul.mubr.bf16.gmra.mxu0 %v489
    %v528 = vpop.f32.mrf.mxu0
    %v529 = vadd.f32 0.0, %v528
    %v530 = vpop.f32.mrf.mxu0
    %v531 = vpop.f32.mrf.mxu0
    %v532 = vpop.f32.mrf.mxu0
    %533 = vdwg.mxu0
    %535 = vrot.lane.b32.xlu0 %v237, 96
    %v536 = vpop.permute.xlu0 %535
    %v538 = vsel %vm242, %v237, 0
    %v541 = vsel %vm242, %v536, 0
    %543 = vmatprep.subr.bf16.mxu0 0
    %544 = vmatpush1.bf16.xpose.msra.mxu0 0
    %545 = vmatprep.subr.bf16.mxu0 0
    %546 = vmatpush1.bf16.xpose.msra.mxu0 0
    %547 = vmatprep.subr.bf16.mxu0 0
    %548 = vmatpush1.bf16.xpose.msra.mxu0 0
    %549 = vmatprep.subr.bf16.mxu0 0
    %550 = vmatpush1.bf16.xpose.msra.mxu0 0
    %551 = vmatprep.subr.bf16.mxu0 0
    %552 = vmatpush1.bf16.xpose.msra.mxu0 0
    %553 = vmatprep.subr.bf16.mxu0 0
    %554 = vmatpush1.bf16.xpose.msra.mxu0 0
    %555 = vmatprep.subr.bf16.mxu0 0
    %556 = vmatpush1.bf16.xpose.msra.mxu0 0
    %557 = vmatprep.subr.bf16.mxu0 0
    %558 = vmatpush1.bf16.xpose.msra.mxu0 %v541
    %559 = vmatprep.subr.bf16.mxu0 0
    %560 = vmatpush2.bf16.xpose.msra.mxu0 0
    %561 = vmatprep.subr.bf16.mxu0 0
    %562 = vmatpush2.bf16.xpose.msra.mxu0 0
    %563 = vmatprep.subr.bf16.mxu0 0
    %564 = vmatpush2.bf16.xpose.msra.mxu0 0
    %565 = vmatprep.subr.bf16.mxu0 0
    %566 = vmatpush2.bf16.xpose.msra.mxu0 0
    %567 = vmatprep.subr.bf16.mxu0 0
    %568 = vmatpush2.bf16.xpose.msra.mxu0 0
    %569 = vmatprep.subr.bf16.mxu0 0
    %570 = vmatpush2.bf16.xpose.msra.mxu0 0
    %571 = vmatprep.subr.bf16.mxu0 0
    %572 = vmatpush2.bf16.xpose.msra.mxu0 0
    %573 = vmatprep.subr.bf16.mxu0 0
    %574 = vmatpush2.bf16.xpose.msra.mxu0 0
    %575 = vmatprep.mubr.bf16.mxu0 0
    %576 = vmatmul.mubr.bf16.gmra.mxu0 %v538
    %v577 = vpop.f32.mrf.mxu0
    %v578 = vadd.f32 0.0, %v577
    %v579 = vpop.f32.mrf.mxu0
    %v580 = vpop.f32.mrf.mxu0
    %v581 = vpop.f32.mrf.mxu0
    %582 = vdwg.mxu0
    %584 = vrot.lane.b32.xlu0 %v238, 96
    %v585 = vpop.permute.xlu0 %584
    %v587 = vsel %vm242, %v238, 0
    %v590 = vsel %vm242, %v585, 0
    %592 = vmatprep.subr.bf16.mxu0 0
    %593 = vmatpush1.bf16.xpose.msra.mxu0 0
    %594 = vmatprep.subr.bf16.mxu0 0
    %595 = vmatpush1.bf16.xpose.msra.mxu0 0
    %596 = vmatprep.subr.bf16.mxu0 0
    %597 = vmatpush1.bf16.xpose.msra.mxu0 0
    %598 = vmatprep.subr.bf16.mxu0 0
    %599 = vmatpush1.bf16.xpose.msra.mxu0 0
    %600 = vmatprep.subr.bf16.mxu0 0
    %601 = vmatpush1.bf16.xpose.msra.mxu0 0
    %602 = vmatprep.subr.bf16.mxu0 0
    %603 = vmatpush1.bf16.xpose.msra.mxu0 0
    %604 = vmatprep.subr.bf16.mxu0 0
    %605 = vmatpush1.bf16.xpose.msra.mxu0 0
    %606 = vmatprep.subr.bf16.mxu0 0
    %607 = vmatpush1.bf16.xpose.msra.mxu0 %v590
    %608 = vmatprep.subr.bf16.mxu0 0
    %609 = vmatpush2.bf16.xpose.msra.mxu0 0
    %610 = vmatprep.subr.bf16.mxu0 0
    %611 = vmatpush2.bf16.xpose.msra.mxu0 0
    %612 = vmatprep.subr.bf16.mxu0 0
    %613 = vmatpush2.bf16.xpose.msra.mxu0 0
    %614 = vmatprep.subr.bf16.mxu0 0
    %615 = vmatpush2.bf16.xpose.msra.mxu0 0
    %616 = vmatprep.subr.bf16.mxu0 0
    %617 = vmatpush2.bf16.xpose.msra.mxu0 0
    %618 = vmatprep.subr.bf16.mxu0 0
    %619 = vmatpush2.bf16.xpose.msra.mxu0 0
    %620 = vmatprep.subr.bf16.mxu0 0
    %621 = vmatpush2.bf16.xpose.msra.mxu0 0
    %622 = vmatprep.subr.bf16.mxu0 0
    %623 = vmatpush2.bf16.xpose.msra.mxu0 0
    %624 = vmatprep.mubr.bf16.mxu0 0
    %625 = vmatmul.mubr.bf16.gmra.mxu0 %v587
    %v626 = vpop.f32.mrf.mxu0
    %v627 = vadd.f32 0.0, %v626
    %v628 = vpop.f32.mrf.mxu0
    %v629 = vpop.f32.mrf.mxu0
    %v630 = vpop.f32.mrf.mxu0
    %631 = vdwg.mxu0
    %v632 = vsel %vm242, %v284, -inf
    %633 = vmax.xlane.f32.xlu0 %v632
    %v634 = vpop.xlane.xlu0 %633
    %v635 = vsel %vm242, %v333, -inf
    %636 = vmax.xlane.f32.xlu0 %v635
    %v637 = vpop.xlane.xlu0 %636
    %v638 = vsel %vm242, %v382, -inf
    %639 = vmax.xlane.f32.xlu0 %v638
    %v640 = vpop.xlane.xlu0 %639
    %v641 = vsel %vm242, %v431, -inf
    %642 = vmax.xlane.f32.xlu0 %v641
    %v643 = vpop.xlane.xlu0 %642
    %v644 = vsel %vm242, %v480, -inf
    %645 = vmax.xlane.f32.xlu0 %v644
    %v646 = vpop.xlane.xlu0 %645
    %v647 = vsel %vm242, %v529, -inf
    %648 = vmax.xlane.f32.xlu0 %v647
    %v649 = vpop.xlane.xlu0 %648
    %v650 = vsel %vm242, %v578, -inf
    %651 = vmax.xlane.f32.xlu0 %v650
    %v652 = vpop.xlane.xlu0 %651
    %v653 = vsel %vm242, %v627, -inf
    %654 = vmax.xlane.f32.xlu0 %v653
    %v655 = vpop.xlane.xlu0 %654
    %v656 = vsub.f32 %v284, %v634
    %v657 = vsub.f32 %v333, %v637
    %v658 = vsub.f32 %v382, %v640
    %v659 = vsub.f32 %v431, %v643
    %v660 = vsub.f32 %v480, %v646
    %v661 = vsub.f32 %v529, %v649
    %v662 = vsub.f32 %v578, %v652
    %v663 = vsub.f32 %v627, %v655
    %v664 = vmul.f32 %v656, 1.442695
    %v665 = vpow.pop %v664
    %v666 = vmul.f32 %v657, 1.442695
    %v667 = vpow.pop %v666
    %v668 = vmul.f32 %v658, 1.442695
    %v669 = vpow.pop %v668
    %v670 = vmul.f32 %v659, 1.442695
    %v671 = vpow.pop %v670
    %v672 = vmul.f32 %v660, 1.442695
    %v673 = vpow.pop %v672
    %v674 = vmul.f32 %v661, 1.442695
    %v675 = vpow.pop %v674
    %v676 = vmul.f32 %v662, 1.442695
    %v677 = vpow.pop %v676
    %v678 = vmul.f32 %v663, 1.442695
    %v679 = vpow.pop %v678
    %v680 = vsel %vm242, %v665, 0.0
    %681 = vadd.xlane.f32.xlu0 %v680
    %v682 = vpop.xlane.xlu0 %681
    %v683 = vsel %vm242, %v667, 0.0
    %684 = vadd.xlane.f32.xlu0 %v683
    %v685 = vpop.xlane.xlu0 %684
    %v686 = vsel %vm242, %v669, 0.0
    %687 = vadd.xlane.f32.xlu0 %v686
    %v688 = vpop.xlane.xlu0 %687
    %v689 = vsel %vm242, %v671, 0.0
    %690 = vadd.xlane.f32.xlu0 %v689
    %v691 = vpop.xlane.xlu0 %690
    %v692 = vsel %vm242, %v673, 0.0
    %693 = vadd.xlane.f32.xlu0 %v692
    %v694 = vpop.xlane.xlu0 %693
    %v695 = vsel %vm242, %v675, 0.0
    %696 = vadd.xlane.f32.xlu0 %v695
    %v697 = vpop.xlane.xlu0 %696
    %v698 = vsel %vm242, %v677, 0.0
    %699 = vadd.xlane.f32.xlu0 %v698
    %v700 = vpop.xlane.xlu0 %699
    %v701 = vsel %vm242, %v679, 0.0
    %702 = vadd.xlane.f32.xlu0 %v701
    %v703 = vpop.xlane.xlu0 %702
    %v704 = vrcp.pop %v682
    %v705 = vmul.f32 %v665, %v704
    %v706 = vrcp.pop %v685
    %v707 = vmul.f32 %v667, %v706
    %v708 = vrcp.pop %v688
    %v709 = vmul.f32 %v669, %v708
    %v710 = vrcp.pop %v691
    %v711 = vmul.f32 %v671, %v710
    %v712 = vrcp.pop %v694
    %v713 = vmul.f32 %v673, %v712
    %v714 = vrcp.pop %v697
    %v715 = vmul.f32 %v675, %v714
    %v716 = vrcp.pop %v700
    %v717 = vmul.f32 %v677, %v716
    %v718 = vrcp.pop %v703
    %v719 = vmul.f32 %v679, %v718
    %v720 = vpack.c.bf16 %v705, %v705
    %v721 = vpack.c.bf16 %v707, %v707
    %v722 = vpack.c.bf16 %v709, %v709
    %v723 = vpack.c.bf16 %v711, %v711
    %v724 = vpack.c.bf16 %v713, %v713
    %v725 = vpack.c.bf16 %v715, %v715
    %v726 = vpack.c.bf16 %v717, %v717
    %v727 = vpack.c.bf16 %v719, %v719
    %728 = vrot.lane.b32.xlu0 %v231, 64
    %v729 = vpop.permute.xlu0 %728
    %v731 = vsel %vm242, %v720, 0
    %vm733 = vcmask 1043456
    %v735 = vsel %vm733, %v729, 0
    %737 = vmatprep.subr.bf16.mxu0 0
    %738 = vmatpush1.bf16.msra.mxu0 0
    %739 = vmatprep.subr.bf16.mxu0 0
    %740 = vmatpush1.bf16.msra.mxu0 0
    %741 = vmatprep.subr.bf16.mxu0 0
    %742 = vmatpush1.bf16.msra.mxu0 0
    %743 = vmatprep.subr.bf16.mxu0 0
    %744 = vmatpush1.bf16.msra.mxu0 0
    %745 = vmatprep.subr.bf16.mxu0 0
    %746 = vmatpush1.bf16.msra.mxu0 0
    %747 = vmatprep.subr.bf16.mxu0 0
    %748 = vmatpush1.bf16.msra.mxu0 0
    %749 = vmatprep.subr.bf16.mxu0 0
    %750 = vmatpush1.bf16.msra.mxu0 0
    %751 = vmatprep.subr.bf16.mxu0 0
    %752 = vmatpush1.bf16.msra.mxu0 %v735
    %753 = vmatprep.subr.bf16.mxu0 0
    %754 = vmatpush2.bf16.msra.mxu0 0
    %755 = vmatprep.subr.bf16.mxu0 0
    %756 = vmatpush2.bf16.msra.mxu0 0
    %757 = vmatprep.subr.bf16.mxu0 0
    %758 = vmatpush2.bf16.msra.mxu0 0
    %759 = vmatprep.subr.bf16.mxu0 0
    %760 = vmatpush2.bf16.msra.mxu0 0
    %761 = vmatprep.subr.bf16.mxu0 0
    %762 = vmatpush2.bf16.msra.mxu0 0
    %763 = vmatprep.subr.bf16.mxu0 0
    %764 = vmatpush2.bf16.msra.mxu0 0
    %765 = vmatprep.subr.bf16.mxu0 0
    %766 = vmatpush2.bf16.msra.mxu0 0
    %767 = vmatprep.subr.bf16.mxu0 0
    %768 = vmatpush2.bf16.msra.mxu0 0
    %769 = vmatprep.mubr.bf16.mxu0 0
    %770 = vmatmul.mubr.bf16.gmra.mxu0 %v731
    %v771 = vpop.f32.mrf.mxu0
    %v772 = vadd.f32 0.0, %v771
    %v773 = vpop.f32.mrf.mxu0
    %v774 = vpop.f32.mrf.mxu0
    %v775 = vpop.f32.mrf.mxu0
    %776 = vdwg.mxu0
    %777 = vrot.lane.b32.xlu0 %v232, 64
    %v778 = vpop.permute.xlu0 %777
    %v780 = vsel %vm242, %v721, 0
    %v783 = vsel %vm733, %v778, 0
    %785 = vmatprep.subr.bf16.mxu0 0
    %786 = vmatpush1.bf16.msra.mxu0 0
    %787 = vmatprep.subr.bf16.mxu0 0
    %788 = vmatpush1.bf16.msra.mxu0 0
    %789 = vmatprep.subr.bf16.mxu0 0
    %790 = vmatpush1.bf16.msra.mxu0 0
    %791 = vmatprep.subr.bf16.mxu0 0
    %792 = vmatpush1.bf16.msra.mxu0 0
    %793 = vmatprep.subr.bf16.mxu0 0
    %794 = vmatpush1.bf16.msra.mxu0 0
    %795 = vmatprep.subr.bf16.mxu0 0
    %796 = vmatpush1.bf16.msra.mxu0 0
    %797 = vmatprep.subr.bf16.mxu0 0
    %798 = vmatpush1.bf16.msra.mxu0 0
    %799 = vmatprep.subr.bf16.mxu0 0
    %800 = vmatpush1.bf16.msra.mxu0 %v783
    %801 = vmatprep.subr.bf16.mxu0 0
    %802 = vmatpush2.bf16.msra.mxu0 0
    %803 = vmatprep.subr.bf16.mxu0 0
    %804 = vmatpush2.bf16.msra.mxu0 0
    %805 = vmatprep.subr.bf16.mxu0 0
    %806 = vmatpush2.bf16.msra.mxu0 0
    %807 = vmatprep.subr.bf16.mxu0 0
    %808 = vmatpush2.bf16.msra.mxu0 0
    %809 = vmatprep.subr.bf16.mxu0 0
    %810 = vmatpush2.bf16.msra.mxu0 0
    %811 = vmatprep.subr.bf16.mxu0 0
    %812 = vmatpush2.bf16.msra.mxu0 0
    %813 = vmatprep.subr.bf16.mxu0 0
    %814 = vmatpush2.bf16.msra.mxu0 0
    %815 = vmatprep.subr.bf16.mxu0 0
    %816 = vmatpush2.bf16.msra.mxu0 0
    %817 = vmatprep.mubr.bf16.mxu0 0
    %818 = vmatmul.mubr.bf16.gmra.mxu0 %v780
    %v819 = vpop.f32.mrf.mxu0
    %v820 = vadd.f32 0.0, %v819
    %v821 = vpop.f32.mrf.mxu0
    %v822 = vpop.f32.mrf.mxu0
    %v823 = vpop.f32.mrf.mxu0
    %824 = vdwg.mxu0
    %825 = vrot.lane.b32.xlu0 %v233, 64
    %v826 = vpop.permute.xlu0 %825
    %v828 = vsel %vm242, %v722, 0
    %v831 = vsel %vm733, %v826, 0
    %833 = vmatprep.subr.bf16.mxu0 0
    %834 = vmatpush1.bf16.msra.mxu0 0
    %835 = vmatprep.subr.bf16.mxu0 0
    %836 = vmatpush1.bf16.msra.mxu0 0
    %837 = vmatprep.subr.bf16.mxu0 0
    %838 = vmatpush1.bf16.msra.mxu0 0
    %839 = vmatprep.subr.bf16.mxu0 0
    %840 = vmatpush1.bf16.msra.mxu0 0
    %841 = vmatprep.subr.bf16.mxu0 0
    %842 = vmatpush1.bf16.msra.mxu0 0
    %843 = vmatprep.subr.bf16.mxu0 0
    %844 = vmatpush1.bf16.msra.mxu0 0
    %845 = vmatprep.subr.bf16.mxu0 0
    %846 = vmatpush1.bf16.msra.mxu0 0
    %847 = vmatprep.subr.bf16.mxu0 0
    %848 = vmatpush1.bf16.msra.mxu0 %v831
    %849 = vmatprep.subr.bf16.mxu0 0
    %850 = vmatpush2.bf16.msra.mxu0 0
    %851 = vmatprep.subr.bf16.mxu0 0
    %852 = vmatpush2.bf16.msra.mxu0 0
    %853 = vmatprep.subr.bf16.mxu0 0
    %854 = vmatpush2.bf16.msra.mxu0 0
    %855 = vmatprep.subr.bf16.mxu0 0
    %856 = vmatpush2.bf16.msra.mxu0 0
    %857 = vmatprep.subr.bf16.mxu0 0
    %858 = vmatpush2.bf16.msra.mxu0 0
    %859 = vmatprep.subr.bf16.mxu0 0
    %860 = vmatpush2.bf16.msra.mxu0 0
    %861 = vmatprep.subr.bf16.mxu0 0
    %862 = vmatpush2.bf16.msra.mxu0 0
    %863 = vmatprep.subr.bf16.mxu0 0
    %864 = vmatpush2.bf16.msra.mxu0 0
    %865 = vmatprep.mubr.bf16.mxu0 0
    %866 = vmatmul.mubr.bf16.gmra.mxu0 %v828
    %v867 = vpop.f32.mrf.mxu0
    %v868 = vadd.f32 0.0, %v867
    %v869 = vpop.f32.mrf.mxu0
    %v870 = vpop.f32.mrf.mxu0
    %v871 = vpop.f32.mrf.mxu0
    %872 = vdwg.mxu0
    %873 = vrot.lane.b32.xlu0 %v234, 64
    %v874 = vpop.permute.xlu0 %873
    %v876 = vsel %vm242, %v723, 0
    %v879 = vsel %vm733, %v874, 0
    %881 = vmatprep.subr.bf16.mxu0 0
    %882 = vmatpush1.bf16.msra.mxu0 0
    %883 = vmatprep.subr.bf16.mxu0 0
    %884 = vmatpush1.bf16.msra.mxu0 0
    %885 = vmatprep.subr.bf16.mxu0 0
    %886 = vmatpush1.bf16.msra.mxu0 0
    %887 = vmatprep.subr.bf16.mxu0 0
    %888 = vmatpush1.bf16.msra.mxu0 0
    %889 = vmatprep.subr.bf16.mxu0 0
    %890 = vmatpush1.bf16.msra.mxu0 0
    %891 = vmatprep.subr.bf16.mxu0 0
    %892 = vmatpush1.bf16.msra.mxu0 0
    %893 = vmatprep.subr.bf16.mxu0 0
    %894 = vmatpush1.bf16.msra.mxu0 0
    %895 = vmatprep.subr.bf16.mxu0 0
    %896 = vmatpush1.bf16.msra.mxu0 %v879
    %897 = vmatprep.subr.bf16.mxu0 0
    %898 = vmatpush2.bf16.msra.mxu0 0
    %899 = vmatprep.subr.bf16.mxu0 0
    %900 = vmatpush2.bf16.msra.mxu0 0
    %901 = vmatprep.subr.bf16.mxu0 0
    %902 = vmatpush2.bf16.msra.mxu0 0
    %903 = vmatprep.subr.bf16.mxu0 0
    %904 = vmatpush2.bf16.msra.mxu0 0
    %905 = vmatprep.subr.bf16.mxu0 0
    %906 = vmatpush2.bf16.msra.mxu0 0
    %907 = vmatprep.subr.bf16.mxu0 0
    %908 = vmatpush2.bf16.msra.mxu0 0
    %909 = vmatprep.subr.bf16.mxu0 0
    %910 = vmatpush2.bf16.msra.mxu0 0
    %911 = vmatprep.subr.bf16.mxu0 0
    %912 = vmatpush2.bf16.msra.mxu0 0
    %913 = vmatprep.mubr.bf16.mxu0 0
    %914 = vmatmul.mubr.bf16.gmra.mxu0 %v876
    %v915 = vpop.f32.mrf.mxu0
    %v916 = vadd.f32 0.0, %v915
    %v917 = vpop.f32.mrf.mxu0
    %v918 = vpop.f32.mrf.mxu0
    %v919 = vpop.f32.mrf.mxu0
    %920 = vdwg.mxu0
    %921 = vrot.lane.b32.xlu0 %v235, 64
    %v922 = vpop.permute.xlu0 %921
    %v924 = vsel %vm242, %v724, 0
    %v927 = vsel %vm733, %v922, 0
    %929 = vmatprep.subr.bf16.mxu0 0
    %930 = vmatpush1.bf16.msra.mxu0 0
    %931 = vmatprep.subr.bf16.mxu0 0
    %932 = vmatpush1.bf16.msra.mxu0 0
    %933 = vmatprep.subr.bf16.mxu0 0
    %934 = vmatpush1.bf16.msra.mxu0 0
    %935 = vmatprep.subr.bf16.mxu0 0
    %936 = vmatpush1.bf16.msra.mxu0 0
    %937 = vmatprep.subr.bf16.mxu0 0
    %938 = vmatpush1.bf16.msra.mxu0 0
    %939 = vmatprep.subr.bf16.mxu0 0
    %940 = vmatpush1.bf16.msra.mxu0 0
    %941 = vmatprep.subr.bf16.mxu0 0
    %942 = vmatpush1.bf16.msra.mxu0 0
    %943 = vmatprep.subr.bf16.mxu0 0
    %944 = vmatpush1.bf16.msra.mxu0 %v927
    %945 = vmatprep.subr.bf16.mxu0 0
    %946 = vmatpush2.bf16.msra.mxu0 0
    %947 = vmatprep.subr.bf16.mxu0 0
    %948 = vmatpush2.bf16.msra.mxu0 0
    %949 = vmatprep.subr.bf16.mxu0 0
    %950 = vmatpush2.bf16.msra.mxu0 0
    %951 = vmatprep.subr.bf16.mxu0 0
    %952 = vmatpush2.bf16.msra.mxu0 0
    %953 = vmatprep.subr.bf16.mxu0 0
    %954 = vmatpush2.bf16.msra.mxu0 0
    %955 = vmatprep.subr.bf16.mxu0 0
    %956 = vmatpush2.bf16.msra.mxu0 0
    %957 = vmatprep.subr.bf16.mxu0 0
    %958 = vmatpush2.bf16.msra.mxu0 0
    %959 = vmatprep.subr.bf16.mxu0 0
    %960 = vmatpush2.bf16.msra.mxu0 0
    %961 = vmatprep.mubr.bf16.mxu0 0
    %962 = vmatmul.mubr.bf16.gmra.mxu0 %v924
    %v963 = vpop.f32.mrf.mxu0
    %v964 = vadd.f32 0.0, %v963
    %v965 = vpop.f32.mrf.mxu0
    %v966 = vpop.f32.mrf.mxu0
    %v967 = vpop.f32.mrf.mxu0
    %968 = vdwg.mxu0
    %969 = vrot.lane.b32.xlu0 %v236, 64
    %v970 = vpop.permute.xlu0 %969
    %v972 = vsel %vm242, %v725, 0
    %v975 = vsel %vm733, %v970, 0
    %977 = vmatprep.subr.bf16.mxu0 0
    %978 = vmatpush1.bf16.msra.mxu0 0
    %979 = vmatprep.subr.bf16.mxu0 0
    %980 = vmatpush1.bf16.msra.mxu0 0
    %981 = vmatprep.subr.bf16.mxu0 0
    %982 = vmatpush1.bf16.msra.mxu0 0
    %983 = vmatprep.subr.bf16.mxu0 0
    %984 = vmatpush1.bf16.msra.mxu0 0
    %985 = vmatprep.subr.bf16.mxu0 0
    %986 = vmatpush1.bf16.msra.mxu0 0
    %987 = vmatprep.subr.bf16.mxu0 0
    %988 = vmatpush1.bf16.msra.mxu0 0
    %989 = vmatprep.subr.bf16.mxu0 0
    %990 = vmatpush1.bf16.msra.mxu0 0
    %991 = vmatprep.subr.bf16.mxu0 0
    %992 = vmatpush1.bf16.msra.mxu0 %v975
    %993 = vmatprep.subr.bf16.mxu0 0
    %994 = vmatpush2.bf16.msra.mxu0 0
    %995 = vmatprep.subr.bf16.mxu0 0
    %996 = vmatpush2.bf16.msra.mxu0 0
    %997 = vmatprep.subr.bf16.mxu0 0
    %998 = vmatpush2.bf16.msra.mxu0 0
    %999 = vmatprep.subr.bf16.mxu0 0
    %1000 = vmatpush2.bf16.msra.mxu0 0
    %1001 = vmatprep.subr.bf16.mxu0 0
    %1002 = vmatpush2.bf16.msra.mxu0 0
    %1003 = vmatprep.subr.bf16.mxu0 0
    %1004 = vmatpush2.bf16.msra.mxu0 0
    %1005 = vmatprep.subr.bf16.mxu0 0
    %1006 = vmatpush2.bf16.msra.mxu0 0
    %1007 = vmatprep.subr.bf16.mxu0 0
    %1008 = vmatpush2.bf16.msra.mxu0 0
    %1009 = vmatprep.mubr.bf16.mxu0 0
    %1010 = vmatmul.mubr.bf16.gmra.mxu0 %v972
    %v1011 = vpop.f32.mrf.mxu0
    %v1012 = vadd.f32 0.0, %v1011
    %v1013 = vpop.f32.mrf.mxu0
    %v1014 = vpop.f32.mrf.mxu0
    %v1015 = vpop.f32.mrf.mxu0
    %1016 = vdwg.mxu0
    %1017 = vrot.lane.b32.xlu0 %v237, 64
    %v1018 = vpop.permute.xlu0 %1017
    %v1020 = vsel %vm242, %v726, 0
    %v1023 = vsel %vm733, %v1018, 0
    %1025 = vmatprep.subr.bf16.mxu0 0
    %1026 = vmatpush1.bf16.msra.mxu0 0
    %1027 = vmatprep.subr.bf16.mxu0 0
    %1028 = vmatpush1.bf16.msra.mxu0 0
    %1029 = vmatprep.subr.bf16.mxu0 0
    %1030 = vmatpush1.bf16.msra.mxu0 0
    %1031 = vmatprep.subr.bf16.mxu0 0
    %1032 = vmatpush1.bf16.msra.mxu0 0
    %1033 = vmatprep.subr.bf16.mxu0 0
    %1034 = vmatpush1.bf16.msra.mxu0 0
    %1035 = vmatprep.subr.bf16.mxu0 0
    %1036 = vmatpush1.bf16.msra.mxu0 0
    %1037 = vmatprep.subr.bf16.mxu0 0
    %1038 = vmatpush1.bf16.msra.mxu0 0
    %1039 = vmatprep.subr.bf16.mxu0 0
    %1040 = vmatpush1.bf16.msra.mxu0 %v1023
    %1041 = vmatprep.subr.bf16.mxu0 0
    %1042 = vmatpush2.bf16.msra.mxu0 0
    %1043 = vmatprep.subr.bf16.mxu0 0
    %1044 = vmatpush2.bf16.msra.mxu0 0
    %1045 = vmatprep.subr.bf16.mxu0 0
    %1046 = vmatpush2.bf16.msra.mxu0 0
    %1047 = vmatprep.subr.bf16.mxu0 0
    %1048 = vmatpush2.bf16.msra.mxu0 0
    %1049 = vmatprep.subr.bf16.mxu0 0
    %1050 = vmatpush2.bf16.msra.mxu0 0
    %1051 = vmatprep.subr.bf16.mxu0 0
    %1052 = vmatpush2.bf16.msra.mxu0 0
    %1053 = vmatprep.subr.bf16.mxu0 0
    %1054 = vmatpush2.bf16.msra.mxu0 0
    %1055 = vmatprep.subr.bf16.mxu0 0
    %1056 = vmatpush2.bf16.msra.mxu0 0
    %1057 = vmatprep.mubr.bf16.mxu0 0
    %1058 = vmatmul.mubr.bf16.gmra.mxu0 %v1020
    %v1059 = vpop.f32.mrf.mxu0
    %v1060 = vadd.f32 0.0, %v1059
    %v1061 = vpop.f32.mrf.mxu0
    %v1062 = vpop.f32.mrf.mxu0
    %v1063 = vpop.f32.mrf.mxu0
    %1064 = vdwg.mxu0
    %1065 = vrot.lane.b32.xlu0 %v238, 64
    %v1066 = vpop.permute.xlu0 %1065
    %v1068 = vsel %vm242, %v727, 0
    %v1071 = vsel %vm733, %v1066, 0
    %1073 = vmatprep.subr.bf16.mxu0 0
    %1074 = vmatpush1.bf16.msra.mxu0 0
    %1075 = vmatprep.subr.bf16.mxu0 0
    %1076 = vmatpush1.bf16.msra.mxu0 0
    %1077 = vmatprep.subr.bf16.mxu0 0
    %1078 = vmatpush1.bf16.msra.mxu0 0
    %1079 = vmatprep.subr.bf16.mxu0 0
    %1080 = vmatpush1.bf16.msra.mxu0 0
    %1081 = vmatprep.subr.bf16.mxu0 0
    %1082 = vmatpush1.bf16.msra.mxu0 0
    %1083 = vmatprep.subr.bf16.mxu0 0
    %1084 = vmatpush1.bf16.msra.mxu0 0
    %1085 = vmatprep.subr.bf16.mxu0 0
    %1086 = vmatpush1.bf16.msra.mxu0 0
    %1087 = vmatprep.subr.bf16.mxu0 0
    %1088 = vmatpush1.bf16.msra.mxu0 %v1071
    %1089 = vmatprep.subr.bf16.mxu0 0
    %1090 = vmatpush2.bf16.msra.mxu0 0
    %1091 = vmatprep.subr.bf16.mxu0 0
    %1092 = vmatpush2.bf16.msra.mxu0 0
    %1093 = vmatprep.subr.bf16.mxu0 0
    %1094 = vmatpush2.bf16.msra.mxu0 0
    %1095 = vmatprep.subr.bf16.mxu0 0
    %1096 = vmatpush2.bf16.msra.mxu0 0
    %1097 = vmatprep.subr.bf16.mxu0 0
    %1098 = vmatpush2.bf16.msra.mxu0 0
    %1099 = vmatprep.subr.bf16.mxu0 0
    %1100 = vmatpush2.bf16.msra.mxu0 0
    %1101 = vmatprep.subr.bf16.mxu0 0
    %1102 = vmatpush2.bf16.msra.mxu0 0
    %1103 = vmatprep.subr.bf16.mxu0 0
    %1104 = vmatpush2.bf16.msra.mxu0 0
    %1105 = vmatprep.mubr.bf16.mxu0 0
    %1106 = vmatmul.mubr.bf16.gmra.mxu0 %v1068
    %v1107 = vpop.f32.mrf.mxu0
    %v1108 = vadd.f32 0.0, %v1107
    %v1109 = vpop.f32.mrf.mxu0
    %v1110 = vpop.f32.mrf.mxu0
    %v1111 = vpop.f32.mrf.mxu0
    %1112 = vdwg.mxu0
    %1115 = vrot.lane.b32.xlu0 %v868, 8
    %v1116 = vpop.permute.xlu0 %1115
    %1117 = vrot.lane.b32.xlu0 %v916, 8
    %v1118 = vpop.permute.xlu0 %1117
    %1123 = vrot.lane.b32.xlu0 %v964, 16
    %v1124 = vpop.permute.xlu0 %1123
    %1125 = vrot.lane.b32.xlu0 %v1012, 16
    %v1126 = vpop.permute.xlu0 %1125
    %1131 = vrot.lane.b32.xlu0 %v1060, 24
    %v1132 = vpop.permute.xlu0 %1131
    %1133 = vrot.lane.b32.xlu0 %v1108, 24
    %v1134 = vpop.permute.xlu0 %1133
    %v1137 = vsel %vm242, %v772, %v1116
    %v1138 = vsel %vm242, %v820, %v1118
    %vm1139 = vcmask 130048
    %v1140 = vsel %vm1139, %v1137, %v1124
    %v1141 = vsel %vm1139, %v1138, %v1126
    %vm1142 = vcmask 195584
    %v1143 = vsel %vm1142, %v1140, %v1132
    %v1144 = vsel %vm1142, %v1141, %v1134
    %v1145 = vpack.c.bf16 %v1144, %v1143
    %v1146 = vld [vmem:[%s5] sm:$0xf]
    %v1147 = vld [vmem:[%s5 + $0x4] sm:$0xf]
    %v1148 = vld [vmem:[%s5 + $0x8] sm:$0xf]
    %v1149 = vld [vmem:[%s5 + $0xc] sm:$0xf]
    %v1150 = vld [vmem:[%s6] sm:$0x1]
    %v1152 = vlaneseq
    %v1153 = vshrl.u32 %v1152, 7
    %v1154 = vsub.s32 0, %v1153
    %v1155 = vrot.slane %v1150, %v1154
    %v1161 = vunpack.c.l.b16 %v1146
    %v1162 = vunpack.c.l.b16 %v1147
    %v1163 = vunpack.c.l.b16 %v1148
    %v1164 = vunpack.c.l.b16 %v1149
    %v1165 = vpack.c.b16 %v1162, %v1161
    %v1166 = vpack.c.b16 %v1164, %v1163
    %v1170 = vsel %vm97, %v1145, 0
    %1172 = vmatprep.subr.bf16.mxu0 0
    %1173 = vmatpush1.bf16.msra.mxu0 0
    %1174 = vmatprep.subr.bf16.mxu0 0
    %1175 = vmatpush1.bf16.msra.mxu0 0
    %1176 = vmatprep.subr.bf16.mxu0 0
    %1177 = vmatpush1.bf16.msra.mxu0 0
    %1178 = vmatprep.subr.bf16.mxu0 0
    %1179 = vmatpush1.bf16.msra.mxu0 0
    %1180 = vmatprep.subr.bf16.mxu0 0
    %1181 = vmatpush1.bf16.msra.mxu0 0
    %1182 = vmatprep.subr.bf16.mxu0 0
    %1183 = vmatpush1.bf16.msra.mxu0 0
    %1184 = vmatprep.subr.bf16.mxu0 0
    %1185 = vmatpush1.bf16.msra.mxu0 %v1166
    %1186 = vmatprep.subr.bf16.mxu0 0
    %1187 = vmatpush1.bf16.msra.mxu0 %v1165
    %1188 = vmatprep.subr.bf16.mxu0 0
    %1189 = vmatpush2.bf16.msra.mxu0 0
    %1190 = vmatprep.subr.bf16.mxu0 0
    %1191 = vmatpush2.bf16.msra.mxu0 0
    %1192 = vmatprep.subr.bf16.mxu0 0
    %1193 = vmatpush2.bf16.msra.mxu0 0
    %1194 = vmatprep.subr.bf16.mxu0 0
    %1195 = vmatpush2.bf16.msra.mxu0 0
    %1196 = vmatprep.subr.bf16.mxu0 0
    %1197 = vmatpush2.bf16.msra.mxu0 0
    %1198 = vmatprep.subr.bf16.mxu0 0
    %1199 = vmatpush2.bf16.msra.mxu0 0
    %1200 = vmatprep.subr.bf16.mxu0 0
    %1201 = vmatpush2.bf16.msra.mxu0 0
    %1202 = vmatprep.subr.bf16.mxu0 0
    %1203 = vmatpush2.bf16.msra.mxu0 0
    %1204 = vmatprep.mubr.bf16.mxu0 0
    %1205 = vmatmul.mubr.bf16.gmra.mxu0 %v1170
    %v1206 = vpop.f32.mrf.mxu0
    %v1207 = vadd.f32 %v1155, %v1206
    %v1208 = vpop.f32.mrf.mxu0
    %v1209 = vpop.f32.mrf.mxu0
    %v1210 = vadd.f32 %v1155, %v1209
    %v1211 = vpop.f32.mrf.mxu0
    %1212 = vdwg.mxu0
    %v1213 = vadd.f32 %v95, %v1207
    %v1214 = vadd.f32 %v96, %v1210
    %v1215 = vsel %vm97, %v1213, 0.0
    %1216 = vadd.xlane.f32.xlu0 %v1215
    %v1217 = vpop.xlane.xlu0 %1216
    %v1218 = vsel %vm97, %v1214, 0.0
    %1219 = vadd.xlane.f32.xlu0 %v1218
    %v1220 = vpop.xlane.xlu0 %1219
    %v1221 = vmul.f32 %v1217, %v104
    %v1222 = vmul.f32 %v1220, %v104
    %v1223 = vsub.f32 %v1213, %v1221
    %v1224 = vsub.f32 %v1214, %v1222
    %v1225 = vmul.f32 %v1223, %v1223
    %v1226 = vmul.f32 %v1224, %v1224
    %v1227 = vsel %vm97, %v1225, 0.0
    %1228 = vadd.xlane.f32.xlu0 %v1227
    %v1229 = vpop.xlane.xlu0 %1228
    %v1230 = vsel %vm97, %v1226, 0.0
    %1231 = vadd.xlane.f32.xlu0 %v1230
    %v1232 = vpop.xlane.xlu0 %1231
    %v1233 = vmul.f32 %v1229, %v104
    %v1234 = vmul.f32 %v1232, %v104
    %v1235 = vadd.f32 %v1233, 1e-06
    %v1236 = vadd.f32 %v1234, 1e-06
    %v1237 = vrsqrt.pop %v1235
    %v1238 = vrsqrt.pop %v1236
    %v1239 = vmul.f32 %v1223, %v1237
    %v1240 = vmul.f32 %v1224, %v1238
    %v1241 = vld [vmem:[#allocation2] sm:$0x1]
    %v1243 = vlaneseq
    %v1244 = vshrl.u32 %v1243, 7
    %v1245 = vsub.s32 0, %v1244
    %v1246 = vrot.slane %v1241, %v1245
    %v1248 = vmul.f32 %v1239, %v1246
    %v1249 = vmul.f32 %v1240, %v1246
    %v1250 = vld [vmem:[#allocation5] sm:$0x1]
    %v1252 = vlaneseq
    %v1253 = vshrl.u32 %v1252, 7
    %v1254 = vsub.s32 0, %v1253
    %v1255 = vrot.slane %v1250, %v1254
    %v1257 = vadd.f32 %v1248, %v1255
    %v1258 = vadd.f32 %v1249, %v1255
    %v1259 = vpack.c.bf16 %v1258, %v1257
    %v1260 = vld [vmem:[#allocation7] sm:$0xf]
    %v1261 = vld [vmem:[#allocation7 + $0x4] sm:$0xf]
    %v1262 = vld [vmem:[#allocation7 + $0x8] sm:$0xf]
    %v1263 = vld [vmem:[#allocation7 + $0xc] sm:$0xf]
    %v1264 = vld [vmem:[#allocation8] sm:$0x1]
    %v1266 = vlaneseq
    %v1267 = vshrl.u32 %v1266, 7
    %v1268 = vsub.s32 0, %v1267
    %v1269 = vrot.slane %v1264, %v1268
    %v1275 = vunpack.c.l.b16 %v1260
    %v1276 = vunpack.c.l.b16 %v1261
    %v1277 = vunpack.c.l.b16 %v1262
    %v1278 = vunpack.c.l.b16 %v1263
    %v1279 = vpack.c.b16 %v1276, %v1275
    %v1280 = vpack.c.b16 %v1278, %v1277
    %v1284 = vsel %vm97, %v1259, 0
    %1286 = vmatprep.subr.bf16.mxu0 0
    %1287 = vmatpush1.bf16.msra.mxu0 0
    %1288 = vmatprep.subr.bf16.mxu0 0
    %1289 = vmatpush1.bf16.msra.mxu0 0
    %1290 = vmatprep.subr.bf16.mxu0 0
    %1291 = vmatpush1.bf16.msra.mxu0 0
    %1292 = vmatprep.subr.bf16.mxu0 0
    %1293 = vmatpush1.bf16.msra.mxu0 0
    %1294 = vmatprep.subr.bf16.mxu0 0
    %1295 = vmatpush1.bf16.msra.mxu0 0
    %1296 = vmatprep.subr.bf16.mxu0 0
    %1297 = vmatpush1.bf16.msra.mxu0 0
    %1298 = vmatprep.subr.bf16.mxu0 0
    %1299 = vmatpush1.bf16.msra.mxu0 %v1280
    %1300 = vmatprep.subr.bf16.mxu0 0
    %1301 = vmatpush1.bf16.msra.mxu0 %v1279
    %1302 = vmatprep.subr.bf16.mxu0 0
    %1303 = vmatpush2.bf16.msra.mxu0 0
    %1304 = vmatprep.subr.bf16.mxu0 0
    %1305 = vmatpush2.bf16.msra.mxu0 0
    %1306 = vmatprep.subr.bf16.mxu0 0
    %1307 = vmatpush2.bf16.msra.mxu0 0
    %1308 = vmatprep.subr.bf16.mxu0 0
    %1309 = vmatpush2.bf16.msra.mxu0 0
    %1310 = vmatprep.subr.bf16.mxu0 0
    %1311 = vmatpush2.bf16.msra.mxu0 0
    %1312 = vmatprep.subr.bf16.mxu0 0
    %1313 = vmatpush2.bf16.msra.mxu0 0
    %1314 = vmatprep.subr.bf16.mxu0 0
    %1315 = vmatpush2.bf16.msra.mxu0 0
    %1316 = vmatprep.subr.bf16.mxu0 0
    %1317 = vmatpush2.bf16.msra.mxu0 0
    %1318 = vmatprep.mubr.bf16.mxu0 0
    %1319 = vmatmul.mubr.bf16.gmra.mxu0 %v1284
    %v1320 = vpop.f32.mrf.mxu0
    %v1321 = vadd.f32 %v1269, %v1320
    %v1322 = vpop.f32.mrf.mxu0
    %v1323 = vpop.f32.mrf.mxu0
    %v1324 = vadd.f32 %v1269, %v1323
    %v1325 = vpop.f32.mrf.mxu0
    %1326 = vdwg.mxu0
    %v1327 = vmax.f32 %v1321, 0.0
    %v1328 = vmax.f32 %v1324, 0.0
    %v1329 = vpack.c.bf16 %v1328, %v1327
    %v1330 = vld [vmem:[%s11] sm:$0xf]
    %v1331 = vld [vmem:[%s11 + $0x4] sm:$0xf]
    %v1332 = vld [vmem:[%s11 + $0x8] sm:$0xf]
    %v1333 = vld [vmem:[%s11 + $0xc] sm:$0xf]
    %v1334 = vld [vmem:[%s11 + $0x10] sm:$0xf]
    %v1335 = vld [vmem:[%s11 + $0x14] sm:$0xf]
    %v1336 = vld [vmem:[%s11 + $0x18] sm:$0xf]
    %v1337 = vld [vmem:[%s11 + $0x1c] sm:$0xf]
    %v1338 = vld [vmem:[%s12] sm:$0x1]
    %v1340 = vlaneseq
    %v1341 = vshrl.u32 %v1340, 7
    %v1342 = vsub.s32 0, %v1341
    %v1343 = vrot.slane %v1338, %v1342
    %v1353 = vunpack.c.l.b16 %v1330
    %v1354 = vunpack.c.l.b16 %v1331
    %v1355 = vunpack.c.l.b16 %v1332
    %v1356 = vunpack.c.l.b16 %v1333
    %v1357 = vunpack.c.l.b16 %v1334
    %v1358 = vunpack.c.l.b16 %v1335
    %v1359 = vunpack.c.l.b16 %v1336
    %v1360 = vunpack.c.l.b16 %v1337
    %v1361 = vpack.c.b16 %v1354, %v1353
    %v1362 = vpack.c.b16 %v1356, %v1355
    %v1363 = vpack.c.b16 %v1358, %v1357
    %v1364 = vpack.c.b16 %v1360, %v1359
    %vm1369 = vcmask 523264
    %v1371 = vsel %vm1369, %v1329, 0
    %1373 = vmatprep.subr.bf16.mxu0 0
    %1374 = vmatpush1.bf16.msra.mxu0 0
    %1375 = vmatprep.subr.bf16.mxu0 0
    %1376 = vmatpush1.bf16.msra.mxu0 0
    %1377 = vmatprep.subr.bf16.mxu0 0
    %1378 = vmatpush1.bf16.msra.mxu0 0
    %1379 = vmatprep.subr.bf16.mxu0 0
    %1380 = vmatpush1.bf16.msra.mxu0 0
    %1381 = vmatprep.subr.bf16.mxu0 0
    %1382 = vmatpush1.bf16.msra.mxu0 %v1364
    %1383 = vmatprep.subr.bf16.mxu0 0
    %1384 = vmatpush1.bf16.msra.mxu0 %v1363
    %1385 = vmatprep.subr.bf16.mxu0 0
    %1386 = vmatpush1.bf16.msra.mxu0 %v1362
    %1387 = vmatprep.subr.bf16.mxu0 0
    %1388 = vmatpush1.bf16.msra.mxu0 %v1361
    %1389 = vmatprep.subr.bf16.mxu0 0
    %1390 = vmatpush2.bf16.msra.mxu0 0
    %1391 = vmatprep.subr.bf16.mxu0 0
    %1392 = vmatpush2.bf16.msra.mxu0 0
    %1393 = vmatprep.subr.bf16.mxu0 0
    %1394 = vmatpush2.bf16.msra.mxu0 0
    %1395 = vmatprep.subr.bf16.mxu0 0
    %1396 = vmatpush2.bf16.msra.mxu0 0
    %1397 = vmatprep.subr.bf16.mxu0 0
    %1398 = vmatpush2.bf16.msra.mxu0 0
    %1399 = vmatprep.subr.bf16.mxu0 0
    %1400 = vmatpush2.bf16.msra.mxu0 0
    %1401 = vmatprep.subr.bf16.mxu0 0
    %1402 = vmatpush2.bf16.msra.mxu0 0
    %1403 = vmatprep.subr.bf16.mxu0 0
    %1404 = vmatpush2.bf16.msra.mxu0 0
    %1405 = vmatprep.mubr.bf16.mxu0 0
    %1406 = vmatmul.mubr.bf16.gmra.mxu0 %v1371
    %v1407 = vpop.f32.mrf.mxu0
    %v1408 = vadd.f32 %v1343, %v1407
    %v1409 = vpop.f32.mrf.mxu0
    %v1410 = vpop.f32.mrf.mxu0
    %v1411 = vadd.f32 %v1343, %v1410
    %v1412 = vpop.f32.mrf.mxu0
    %1413 = vdwg.mxu0
    %v1414 = vadd.f32 %v1213, %v1408
    %v1415 = vadd.f32 %v1214, %v1411
    %1416 = vst.msk [vmem:[#allocation10] sm:$0xff] %vm97, %v1414
    %1417 = vst.msk [vmem:[#allocation10 + $0x8] sm:$0xff] %vm97, %v1415
    // Predicated region
    $region70: #{tpu_custom_call.1} parent=1 // pred_check
      _
    $region71: #{tpu_custom_call.1} parent=1 // pred_check_branch
      %1419 = sbr.rel (0) target = $region73
    $region72: #{tpu_custom_call.1} parent=1 // pred_region
      %s1421 = ssub.s32 256, 256
      %1422 = vsyncadd [#allocation4], %s1421
      %s1423 = sshll.u32 [#allocation10], 4
      %s1424 = int_to_ptr.vmem [resolvable:$true] %s1423
      %1429 = dma.vmem_to_hbm [thread:$0]  %s1424, 256, %s13, [#allocation4], 128, 128, 8
    $region73: #{tpu_custom_call.1} parent=1 // pred_fallthru
      _
    // Predicated region
    $region74: #{tpu_custom_call.1} parent=1 // pred_check
      _
    $region75: #{tpu_custom_call.1} parent=1 // pred_check_branch
      %1431 = sbr.rel (0) target = $region77
    $region76: #{tpu_custom_call.1} parent=1 // pred_region
      %1432 = dma.done [#allocation4], 256
    $region77: #{tpu_custom_call.1} parent=1 // pred_fallthru
      _
    %1433 = vsyncpa [#allocation3], 1
    %1434 = vsyncpa [#allocation6], 1
    %1435 = vsyncpa [#allocation9], 1
    %1436 = vsyncpa [#allocation4], 1

</llo_original>
